<compile_context>
chip_gen: v7x
topology: tpu7x:2x2x1
jax: 0.10.0
libtpu: 0.0.40
codegen_flags: <defaults>
</compile_context>

<pallas_src>
import math
import functools

import jax
import jax.numpy as jnp
import numpy as np
from jax.experimental import pallas as pl
from jax.experimental.pallas import tpu as pltpu


def _mha_kernel(x_ref, w_in_t_ref, b_in_ref, w_out_t_ref, b_out_ref, o_ref,
                *, embed_dim, num_heads, mxu_dtype, approx_recip):
    """Full multi-head self-attention for one batch block, channels-first I/O.

    x_ref:       (BB, E, S)  input block in NCHW-flattened (channels-first) layout
    w_in_t_ref:  (E, 3E)     pre-transposed packed Q/K/V weight (Q rows pre-scaled)
    b_in_ref:    (1, 3E)     packed Q/K/V bias (Q part pre-scaled)
    w_out_t_ref: (E, E)      pre-transposed output projection weight
    b_out_ref:   (1, E)      output projection bias
    o_ref:       (BB, E, S)  output block, channels-first layout
    """
    E = embed_dim
    H = num_heads
    Dh = E // H
    BB, _, S = x_ref.shape

    # ---- NCHW -> sequence layout, in VMEM --------------------------------
    # Per-example 2-D minor transpose (E,S)->(S,E) (known-good Mosaic path),
    # then fold the batch block into the matmul M dimension.  BB is a small
    # static block size, so this Python loop simply unrolls.
    x2 = jnp.concatenate([x_ref[bb].T for bb in range(BB)], axis=0)    # (BB*S, E)

    # ---- fused QKV projection (softmax scale already folded into weights) -
    qkv = jnp.dot(x2.astype(mxu_dtype), w_in_t_ref[...],
                  preferred_element_type=jnp.float32)                  # (BB*S, 3E)
    qkv = qkv + b_in_ref[0]
    qkv_m = qkv.astype(mxu_dtype)

    # ---- head split: (BB*S, 3E) -> (H*BB, S, Dh), heads fused into batch --
    def split_heads(base):
        cols = [qkv_m[:, base + h * Dh: base + (h + 1) * Dh] for h in range(H)]
        stacked = jnp.stack(cols, axis=0)            # (H, BB*S, Dh)
        return stacked.reshape(H * BB, S, Dh)        # leading-dim reshape: free

    qh = split_heads(0)
    kh = split_heads(E)
    vh = split_heads(2 * E)

    # ---- attention: one batched score einsum, one softmax, one ctx einsum -
    s = jnp.einsum("gqd,gkd->gqk", qh, kh,
                   preferred_element_type=jnp.float32)                 # (H*BB, S, S)
    s = s - jnp.max(s, axis=-1, keepdims=True)
    p = jnp.exp(s)
    denom = jnp.sum(p, axis=-1, keepdims=True)
    if approx_recip:
        p = p * pl.reciprocal(denom, approx=True)    # EUP slot, ~free
    else:
        p = p / denom
    ctx = jnp.einsum("gqk,gkd->gqd", p.astype(mxu_dtype), vh,
                     preferred_element_type=jnp.float32)               # (H*BB, S, Dh)

    # ---- head concat fused into ONE K=E output-projection matmul ----------
    ctx_r = ctx.astype(mxu_dtype).reshape(H, BB * S, Dh)
    ctx_all = jnp.concatenate([ctx_r[h] for h in range(H)], axis=-1)   # (BB*S, E)
    out = jnp.dot(ctx_all, w_out_t_ref[...],
                  preferred_element_type=jnp.float32)                  # (BB*S, E)
    out = out + b_out_ref[0]

    # ---- sequence -> NCHW layout, store channels-first ---------------------
    out_bse = out.reshape(BB, S, E)                  # leading-dim split: free
    for bb in range(BB):
        o_ref[bb, :, :] = out_bse[bb].T.astype(o_ref.dtype)


def fully_connected_attention(x, params, *, num_heads, batch_block=None,
                              mxu_dtype=jnp.bfloat16, approx_recip=True):
    """Pallas implementation of FullyConnectedAttention.forward.

    x: (b, c, f, t) float32 (NCHW, like PyTorch)
    params: dict with in_proj_weight (3E,E), in_proj_bias (3E,),
            out_proj_weight (E,E), out_proj_bias (E,)
    batch_block: batch elements per grid step (default: whole batch, single
                 step). Only shard across cores when per-core work is large.
    mxu_dtype:   dtype for MXU operands (bf16 default; f32 for tight parity).
    approx_recip: use approximate EUP reciprocal in the softmax denominator.
    """
    b, c, f, t = x.shape
    E = c
    S = f * t
    H = num_heads
    Dh = E // H
    assert E % H == 0

    if batch_block is None:
        batch_block = b
    assert b % batch_block == 0
    num_blocks = b // batch_block

    # Contiguous NCHW slab viewed as (b, E, S): pure metadata, no transpose op.
    x_ces = x.reshape(b, E, S)

    # Constant weight prep (folds under jit / runs once):
    #  - fold the 1/sqrt(Dh) softmax scale into the Q rows of the packed
    #    in-projection weight and bias,
    #  - pre-transpose both projection weights so the kernel does plain
    #    row-major matmuls,
    #  - cast MXU weight operands to mxu_dtype; biases stay f32 (added to the
    #    f32 accumulators).
    scale = 1.0 / math.sqrt(Dh)
    row_scale = jnp.concatenate(
        [jnp.full((E,), scale, jnp.float32), jnp.ones((2 * E,), jnp.float32)])
    w_in_t = (params["in_proj_weight"] * row_scale[:, None]).T.astype(mxu_dtype)  # (E, 3E)
    b_in = (params["in_proj_bias"] * row_scale).reshape(1, 3 * E).astype(jnp.float32)
    w_out_t = params["out_proj_weight"].T.astype(mxu_dtype)                        # (E, E)
    b_out = params["out_proj_bias"].reshape(1, E).astype(jnp.float32)

    kernel = functools.partial(_mha_kernel, embed_dim=E, num_heads=H,
                               mxu_dtype=mxu_dtype, approx_recip=approx_recip)

    flops = (2 * b * S * E * 3 * E          # QKV projection
             + 4 * b * H * S * S * Dh       # scores + context matmuls
             + 2 * b * S * E * E)           # output projection
    wbytes = jnp.dtype(mxu_dtype).itemsize
    bytes_accessed = int(4 * 2 * b * S * E + wbytes * (3 * E * E + E * E) + 4 * (3 * E + E))
    cost = pl.CostEstimate(flops=flops,
                           transcendentals=b * H * S * S,
                           bytes_accessed=bytes_accessed)

    # Blocks equal the full arrays (single DMA each, one grid step by default).
    # I/O stays (b, E, S) so the wrapper reshapes are free; a fully lane-dense
    # (b, E*S) block would additionally need an in-kernel minor-dim flatten.
    out_ces = pl.pallas_call(
        kernel,
        out_shape=jax.ShapeDtypeStruct((b, E, S), x.dtype),
        grid_spec=pltpu.PrefetchScalarGridSpec(
            num_scalar_prefetch=0,
            grid=(num_blocks,),
            in_specs=[
                pl.BlockSpec((batch_block, E, S), lambda i: (i, 0, 0)),  # x (channels-first)
                pl.BlockSpec((E, 3 * E), lambda i: (0, 0)),   # in_proj_weight^T (Q pre-scaled)
                pl.BlockSpec((1, 3 * E), lambda i: (0, 0)),   # in_proj_bias (Q pre-scaled)
                pl.BlockSpec((E, E), lambda i: (0, 0)),       # out_proj_weight^T
                pl.BlockSpec((1, E), lambda i: (0, 0)),       # out_proj_bias
            ],
            out_specs=pl.BlockSpec((batch_block, E, S), lambda i: (i, 0, 0)),
        ),
        compiler_params=pltpu.CompilerParams(
            dimension_semantics=("parallel",)),
        cost_estimate=cost,
    )(x_ces, w_in_t, b_in, w_out_t, b_out)

    # (b, E, S) is already the NCHW memory layout: final reshape is free.
    return out_ces.reshape(b, c, f, t)


def _reference_mha(x, params, *, num_heads):
    """Pure-JAX reference (mirrors PyTorch nn.MultiheadAttention forward)."""
    b, c, f, t = x.shape
    E = c
    S = f * t
    Dh = E // num_heads
    xs = x.reshape(b, c, S).transpose(0, 2, 1)  # (b, S, E)

    hp = jax.lax.Precision.HIGHEST
    qkv = jnp.einsum("bse,fe->bsf", xs, params["in_proj_weight"],
                     precision=hp) + params["in_proj_bias"]
    q, k, v = jnp.split(qkv, 3, axis=-1)

    def split_heads(a):  # (b, S, E) -> (b, H, S, Dh)
        return a.reshape(b, S, num_heads, Dh).transpose(0, 2, 1, 3)

    qh, kh, vh = split_heads(q), split_heads(k), split_heads(v)
    scores = jnp.einsum("bhqd,bhkd->bhqk", qh, kh, precision=hp) / math.sqrt(Dh)
    probs = jax.nn.softmax(scores, axis=-1)
    ctx = jnp.einsum("bhqk,bhkd->bhqd", probs, vh, precision=hp)
    ctx = ctx.transpose(0, 2, 1, 3).reshape(b, S, E)
    out = jnp.einsum("bse,fe->bsf", ctx, params["out_proj_weight"],
                     precision=hp) + params["out_proj_bias"]
    return out.transpose(0, 2, 1).reshape(b, c, f, t)


def init_params(key, embed_dim):
    """Synthetic parameters matching nn.MultiheadAttention shapes.

    PyTorch initializes the biases to zero; they are nonzero here so the bias
    add and the Q-scale folding are actually exercised by the test.
    """
    E = embed_dim
    k1, k2, k3, k4 = jax.random.split(key, 4)
    bound = 1.0 / math.sqrt(E)
    return {
        "in_proj_weight": jax.random.uniform(
            k1, (3 * E, E), jnp.float32, -bound, bound),
        "in_proj_bias": 0.1 * jax.random.normal(k3, (3 * E,), jnp.float32),
        "out_proj_weight": jax.random.uniform(
            k2, (E, E), jnp.float32, -bound, bound),
        "out_proj_bias": 0.1 * jax.random.normal(k4, (E,), jnp.float32),
    }


if __name__ == "__main__":
    # Shapes consistent with the module: embed_dim = channels = 32,
    # num_heads = 4, spatial 4x4 -> sequence length 16.
    B, C, F, T = 2, 32, 4, 4
    NUM_HEADS = 4

    key = jax.random.PRNGKey(0)
    kx, kp = jax.random.split(key)
    x = jax.random.normal(kx, (B, C, F, T), dtype=jnp.float32)
    params = init_params(kp, C)

    ref = jax.block_until_ready(_reference_mha(x, params, num_heads=NUM_HEADS))

    # Default path: bf16 MXU operands + approx EUP reciprocal (f32 accumulation).
    out = jax.block_until_ready(
        fully_connected_attention(x, params, num_heads=NUM_HEADS))
    np.testing.assert_allclose(np.asarray(out), np.asarray(ref),
                               rtol=2e-2, atol=2e-2)

    # Tight-parity path: f32 MXU operands, exact softmax divide.
    out_f32 = jax.block_until_ready(
        fully_connected_attention(x, params, num_heads=NUM_HEADS,
                                  mxu_dtype=jnp.float32, approx_recip=False))
    np.testing.assert_allclose(np.asarray(out_f32), np.asarray(ref),
                               rtol=5e-3, atol=5e-3)

    print("KERNEL_OK")
</pallas_src>

<mosaic_0001>
module attributes {stable_mosaic.version = 11 : i64} {
  func.func @_mha_kernel(%arg0: i32, %arg1: memref<2x32x16xf32, #tpu.memory_space<vmem>>, %arg2: memref<32x96xbf16, #tpu.memory_space<vmem>>, %arg3: memref<1x96xf32, #tpu.memory_space<vmem>>, %arg4: memref<32x32xbf16, #tpu.memory_space<vmem>>, %arg5: memref<1x32xf32, #tpu.memory_space<vmem>>, %arg6: memref<2x32x16xf32, #tpu.memory_space<vmem>>) attributes {dimension_semantics = [#tpu.dimension_semantics<parallel>], iteration_bounds = array<i64: 1>, scalar_prefetch = 0 : i64, scratch_operands = 0 : i64, tpu.core_type = #tpu.core_type<tc>, window_params = [{transform_indices = @transform_0, window_bounds = array<i64: 2, 32, 16>}, {pipeline_mode = #tpu.pipeline_mode<synchronous>, transform_indices = @transform_1, window_bounds = array<i64: 32, 96>}, {pipeline_mode = #tpu.pipeline_mode<synchronous>, transform_indices = @transform_2, window_bounds = array<i64: 1, 96>}, {pipeline_mode = #tpu.pipeline_mode<synchronous>, transform_indices = @transform_3, window_bounds = array<i64: 32, 32>}, {pipeline_mode = #tpu.pipeline_mode<synchronous>, transform_indices = @transform_4, window_bounds = array<i64: 1, 32>}, {transform_indices = @transform_5, window_bounds = array<i64: 2, 32, 16>}]} {
    %c0 = arith.constant 0 : index
    %c0_0 = arith.constant 0 : index
    %c0_1 = arith.constant 0 : index
    %0 = vector.load %arg1[%c0, %c0_0, %c0_1] : memref<2x32x16xf32, #tpu.memory_space<vmem>>, vector<1x32x16xf32>
    %1 = vector.shape_cast %0 : vector<1x32x16xf32> to vector<32x16xf32>
    %2 = tpu.transpose %1, [1, 0] : vector<32x16xf32> -> vector<16x32xf32>
    %c1 = arith.constant 1 : index
    %c0_2 = arith.constant 0 : index
    %c0_3 = arith.constant 0 : index
    %3 = vector.load %arg1[%c1, %c0_2, %c0_3] : memref<2x32x16xf32, #tpu.memory_space<vmem>>, vector<1x32x16xf32>
    %4 = vector.shape_cast %3 : vector<1x32x16xf32> to vector<32x16xf32>
    %5 = tpu.transpose %4, [1, 0] : vector<32x16xf32> -> vector<16x32xf32>
    %6 = tpu.concatenate %2, %5 in 0 : vector<16x32xf32>, vector<16x32xf32> -> vector<32x32xf32>
    %7 = arith.truncf %6 : vector<32x32xf32> to vector<32x32xbf16>
    %c0_4 = arith.constant 0 : index
    %c0_5 = arith.constant 0 : index
    %8 = vector.load %arg2[%c0_4, %c0_5] : memref<32x96xbf16, #tpu.memory_space<vmem>>, vector<32x96xbf16>
    %cst = arith.constant dense<0.000000e+00> : vector<32x96xf32>
    %9 = tpu.matmul %7, %8, %cst {dimension_numbers = #tpu.dot_dimension_numbers<[1], [0], [0], [1], [0, 0, 1, 1], [], []>} : vector<32x32xbf16>, vector<32x96xbf16>, vector<32x96xf32> -> vector<32x96xf32>
    %c0_6 = arith.constant 0 : index
    %c0_7 = arith.constant 0 : index
    %10 = vector.load %arg3[%c0_6, %c0_7] : memref<1x96xf32, #tpu.memory_space<vmem>>, vector<1x96xf32>
    %11 = vector.shape_cast %10 : vector<1x96xf32> to vector<96xf32>
    %12 = vector.shape_cast %11 : vector<96xf32> to vector<1x96xf32>
    %13 = vector.broadcast %12 : vector<1x96xf32> to vector<32x96xf32>
    %14 = arith.addf %9, %13 : vector<32x96xf32>
    %15 = arith.truncf %14 : vector<32x96xf32> to vector<32x96xbf16>
    %16 = vector.extract_strided_slice %15 {offsets = [0, 0], sizes = [32, 8], strides = [1, 1]} : vector<32x96xbf16> to vector<32x8xbf16>
    %17 = vector.extract_strided_slice %15 {offsets = [0, 8], sizes = [32, 8], strides = [1, 1]} : vector<32x96xbf16> to vector<32x8xbf16>
    %18 = vector.extract_strided_slice %15 {offsets = [0, 16], sizes = [32, 8], strides = [1, 1]} : vector<32x96xbf16> to vector<32x8xbf16>
    %19 = vector.extract_strided_slice %15 {offsets = [0, 24], sizes = [32, 8], strides = [1, 1]} : vector<32x96xbf16> to vector<32x8xbf16>
    %20 = vector.shape_cast %16 : vector<32x8xbf16> to vector<1x32x8xbf16>
    %21 = vector.shape_cast %17 : vector<32x8xbf16> to vector<1x32x8xbf16>
    %22 = vector.shape_cast %18 : vector<32x8xbf16> to vector<1x32x8xbf16>
    %23 = vector.shape_cast %19 : vector<32x8xbf16> to vector<1x32x8xbf16>
    %24 = tpu.concatenate %20, %21, %22, %23 in 0 : vector<1x32x8xbf16>, vector<1x32x8xbf16>, vector<1x32x8xbf16>, vector<1x32x8xbf16> -> vector<4x32x8xbf16>
    %25 = vector.shape_cast %24 : vector<4x32x8xbf16> to vector<8x16x8xbf16>
    %26 = vector.extract_strided_slice %15 {offsets = [0, 32], sizes = [32, 8], strides = [1, 1]} : vector<32x96xbf16> to vector<32x8xbf16>
    %27 = vector.extract_strided_slice %15 {offsets = [0, 40], sizes = [32, 8], strides = [1, 1]} : vector<32x96xbf16> to vector<32x8xbf16>
    %28 = vector.extract_strided_slice %15 {offsets = [0, 48], sizes = [32, 8], strides = [1, 1]} : vector<32x96xbf16> to vector<32x8xbf16>
    %29 = vector.extract_strided_slice %15 {offsets = [0, 56], sizes = [32, 8], strides = [1, 1]} : vector<32x96xbf16> to vector<32x8xbf16>
    %30 = vector.shape_cast %26 : vector<32x8xbf16> to vector<1x32x8xbf16>
    %31 = vector.shape_cast %27 : vector<32x8xbf16> to vector<1x32x8xbf16>
    %32 = vector.shape_cast %28 : vector<32x8xbf16> to vector<1x32x8xbf16>
    %33 = vector.shape_cast %29 : vector<32x8xbf16> to vector<1x32x8xbf16>
    %34 = tpu.concatenate %30, %31, %32, %33 in 0 : vector<1x32x8xbf16>, vector<1x32x8xbf16>, vector<1x32x8xbf16>, vector<1x32x8xbf16> -> vector<4x32x8xbf16>
    %35 = vector.shape_cast %34 : vector<4x32x8xbf16> to vector<8x16x8xbf16>
    %36 = vector.extract_strided_slice %15 {offsets = [0, 64], sizes = [32, 8], strides = [1, 1]} : vector<32x96xbf16> to vector<32x8xbf16>
    %37 = vector.extract_strided_slice %15 {offsets = [0, 72], sizes = [32, 8], strides = [1, 1]} : vector<32x96xbf16> to vector<32x8xbf16>
    %38 = vector.extract_strided_slice %15 {offsets = [0, 80], sizes = [32, 8], strides = [1, 1]} : vector<32x96xbf16> to vector<32x8xbf16>
    %39 = vector.extract_strided_slice %15 {offsets = [0, 88], sizes = [32, 8], strides = [1, 1]} : vector<32x96xbf16> to vector<32x8xbf16>
    %40 = vector.shape_cast %36 : vector<32x8xbf16> to vector<1x32x8xbf16>
    %41 = vector.shape_cast %37 : vector<32x8xbf16> to vector<1x32x8xbf16>
    %42 = vector.shape_cast %38 : vector<32x8xbf16> to vector<1x32x8xbf16>
    %43 = vector.shape_cast %39 : vector<32x8xbf16> to vector<1x32x8xbf16>
    %44 = tpu.concatenate %40, %41, %42, %43 in 0 : vector<1x32x8xbf16>, vector<1x32x8xbf16>, vector<1x32x8xbf16>, vector<1x32x8xbf16> -> vector<4x32x8xbf16>
    %45 = vector.shape_cast %44 : vector<4x32x8xbf16> to vector<8x16x8xbf16>
    "tpu.trace_start"() <{level = 10 : i32, message = "gqd,gkd->gqk"}> : () -> ()
    %cst_8 = arith.constant dense<0.000000e+00> : vector<8x16x16xf32>
    %46 = tpu.matmul %25, %35, %cst_8 {dimension_numbers = #tpu.dot_dimension_numbers<[2], [2], [1], [1], [0, 0, 0, 1, 1, 1], [0], [0]>} : vector<8x16x8xbf16>, vector<8x16x8xbf16>, vector<8x16x16xf32> -> vector<8x16x16xf32>
    "tpu.trace_stop"() : () -> ()
    %cst_9 = arith.constant dense<0xFF800000> : vector<8x16xf32>
    %47 = vector.multi_reduction <maximumf>, %46, %cst_9 [2] : vector<8x16x16xf32> to vector<8x16xf32>
    %48 = vector.shape_cast %47 : vector<8x16xf32> to vector<8x16x1xf32>
    %49 = vector.broadcast %48 : vector<8x16x1xf32> to vector<8x16x16xf32>
    %50 = arith.subf %46, %49 : vector<8x16x16xf32>
    %51 = math.exp %50 : vector<8x16x16xf32>
    %cst_10 = arith.constant dense<0.000000e+00> : vector<8x16xf32>
    %52 = vector.multi_reduction <add>, %51, %cst_10 [2] : vector<8x16x16xf32> to vector<8x16xf32>
    %53 = vector.shape_cast %52 : vector<8x16xf32> to vector<8x16x1xf32>
    %54 = tpu.reciprocal %53 {approx = true} : vector<8x16x1xf32> -> vector<8x16x1xf32>
    %55 = vector.broadcast %54 : vector<8x16x1xf32> to vector<8x16x16xf32>
    %56 = arith.mulf %51, %55 : vector<8x16x16xf32>
    %57 = arith.truncf %56 : vector<8x16x16xf32> to vector<8x16x16xbf16>
    "tpu.trace_start"() <{level = 10 : i32, message = "gqk,gkd->gqd"}> : () -> ()
    %cst_11 = arith.constant dense<0.000000e+00> : vector<8x16x8xf32>
    %58 = tpu.matmul %57, %45, %cst_11 {dimension_numbers = #tpu.dot_dimension_numbers<[2], [1], [1], [2], [0, 0, 0, 1, 1, 2], [0], [0]>} : vector<8x16x16xbf16>, vector<8x16x8xbf16>, vector<8x16x8xf32> -> vector<8x16x8xf32>
    "tpu.trace_stop"() : () -> ()
    %59 = arith.truncf %58 : vector<8x16x8xf32> to vector<8x16x8xbf16>
    %60 = vector.shape_cast %59 : vector<8x16x8xbf16> to vector<4x32x8xbf16>
    %61 = vector.extract_strided_slice %60 {offsets = [0, 0, 0], sizes = [1, 32, 8], strides = [1, 1, 1]} : vector<4x32x8xbf16> to vector<1x32x8xbf16>
    %62 = vector.shape_cast %61 : vector<1x32x8xbf16> to vector<32x8xbf16>
    %63 = vector.extract_strided_slice %60 {offsets = [1, 0, 0], sizes = [1, 32, 8], strides = [1, 1, 1]} : vector<4x32x8xbf16> to vector<1x32x8xbf16>
    %64 = vector.shape_cast %63 : vector<1x32x8xbf16> to vector<32x8xbf16>
    %65 = vector.extract_strided_slice %60 {offsets = [2, 0, 0], sizes = [1, 32, 8], strides = [1, 1, 1]} : vector<4x32x8xbf16> to vector<1x32x8xbf16>
    %66 = vector.shape_cast %65 : vector<1x32x8xbf16> to vector<32x8xbf16>
    %67 = vector.extract_strided_slice %60 {offsets = [3, 0, 0], sizes = [1, 32, 8], strides = [1, 1, 1]} : vector<4x32x8xbf16> to vector<1x32x8xbf16>
    %68 = vector.shape_cast %67 : vector<1x32x8xbf16> to vector<32x8xbf16>
    %69 = tpu.concatenate %62, %64, %66, %68 in 1 : vector<32x8xbf16>, vector<32x8xbf16>, vector<32x8xbf16>, vector<32x8xbf16> -> vector<32x32xbf16>
    %c0_12 = arith.constant 0 : index
    %c0_13 = arith.constant 0 : index
    %70 = vector.load %arg4[%c0_12, %c0_13] : memref<32x32xbf16, #tpu.memory_space<vmem>>, vector<32x32xbf16>
    %cst_14 = arith.constant dense<0.000000e+00> : vector<32x32xf32>
    %71 = tpu.matmul %69, %70, %cst_14 {dimension_numbers = #tpu.dot_dimension_numbers<[1], [0], [0], [1], [0, 0, 1, 1], [], []>} : vector<32x32xbf16>, vector<32x32xbf16>, vector<32x32xf32> -> vector<32x32xf32>
    %c0_15 = arith.constant 0 : index
    %c0_16 = arith.constant 0 : index
    %72 = vector.load %arg5[%c0_15, %c0_16] : memref<1x32xf32, #tpu.memory_space<vmem>>, vector<1x32xf32>
    %73 = vector.shape_cast %72 : vector<1x32xf32> to vector<32xf32>
    %74 = vector.shape_cast %73 : vector<32xf32> to vector<1x32xf32>
    %75 = vector.broadcast %74 : vector<1x32xf32> to vector<32x32xf32>
    %76 = arith.addf %71, %75 : vector<32x32xf32>
    %77 = vector.shape_cast %76 : vector<32x32xf32> to vector<2x16x32xf32>
    %78 = vector.extract_strided_slice %77 {offsets = [0, 0, 0], sizes = [1, 16, 32], strides = [1, 1, 1]} : vector<2x16x32xf32> to vector<1x16x32xf32>
    %79 = vector.shape_cast %78 : vector<1x16x32xf32> to vector<16x32xf32>
    %80 = tpu.transpose %79, [1, 0] : vector<16x32xf32> -> vector<32x16xf32>
    %c0_17 = arith.constant 0 : index
    %c0_18 = arith.constant 0 : index
    %c0_19 = arith.constant 0 : index
    %81 = vector.load %arg6[%c0_17, %c0_18, %c0_19] : memref<2x32x16xf32, #tpu.memory_space<vmem>>, vector<1x32x16xf32>
    %82 = vector.shape_cast %81 : vector<1x32x16xf32> to vector<32x16xf32>
    %83 = vector.shape_cast %80 : vector<32x16xf32> to vector<1x32x16xf32>
    tpu.vector_store %arg6[%c0_17, %c0_18, %c0_19], %83 {strides = array<i32>} : memref<2x32x16xf32, #tpu.memory_space<vmem>>, vector<1x32x16xf32>,
    %84 = vector.extract_strided_slice %77 {offsets = [1, 0, 0], sizes = [1, 16, 32], strides = [1, 1, 1]} : vector<2x16x32xf32> to vector<1x16x32xf32>
    %85 = vector.shape_cast %84 : vector<1x16x32xf32> to vector<16x32xf32>
    %86 = tpu.transpose %85, [1, 0] : vector<16x32xf32> -> vector<32x16xf32>
    %c1_20 = arith.constant 1 : index
    %c0_21 = arith.constant 0 : index
    %c0_22 = arith.constant 0 : index
    %87 = vector.load %arg6[%c1_20, %c0_21, %c0_22] : memref<2x32x16xf32, #tpu.memory_space<vmem>>, vector<1x32x16xf32>
    %88 = vector.shape_cast %87 : vector<1x32x16xf32> to vector<32x16xf32>
    %89 = vector.shape_cast %86 : vector<32x16xf32> to vector<1x32x16xf32>
    tpu.vector_store %arg6[%c1_20, %c0_21, %c0_22], %89 {strides = array<i32>} : memref<2x32x16xf32, #tpu.memory_space<vmem>>, vector<1x32x16xf32>,
    return
  }
  func.func @transform_0(%arg0: i32) -> (i32, i32, i32) {
    %c0_i32 = arith.constant 0 : i32
    %c0_i32_0 = arith.constant 0 : i32
    %c0_i32_1 = arith.constant 0 : i32
    return %arg0, %c0_i32, %c0_i32_0 : i32, i32, i32
  }
  func.func @transform_1(%arg0: i32) -> (i32, i32) {
    %c0_i32 = arith.constant 0 : i32
    %c0_i32_0 = arith.constant 0 : i32
    %c0_i32_1 = arith.constant 0 : i32
    return %c0_i32, %c0_i32_0 : i32, i32
  }
  func.func @transform_2(%arg0: i32) -> (i32, i32) {
    %c0_i32 = arith.constant 0 : i32
    %c0_i32_0 = arith.constant 0 : i32
    %c0_i32_1 = arith.constant 0 : i32
    return %c0_i32, %c0_i32_0 : i32, i32
  }
  func.func @transform_3(%arg0: i32) -> (i32, i32) {
    %c0_i32 = arith.constant 0 : i32
    %c0_i32_0 = arith.constant 0 : i32
    %c0_i32_1 = arith.constant 0 : i32
    return %c0_i32, %c0_i32_0 : i32, i32
  }
  func.func @transform_4(%arg0: i32) -> (i32, i32) {
    %c0_i32 = arith.constant 0 : i32
    %c0_i32_0 = arith.constant 0 : i32
    %c0_i32_1 = arith.constant 0 : i32
    return %c0_i32, %c0_i32_0 : i32, i32
  }
  func.func @transform_5(%arg0: i32) -> (i32, i32, i32) {
    %c0_i32 = arith.constant 0 : i32
    %c0_i32_0 = arith.constant 0 : i32
    %c0_i32_1 = arith.constant 0 : i32
    return %arg0, %c0_i32, %c0_i32_0 : i32, i32, i32
  }
}

</mosaic_0001>

<llo_original>
// kernel: tpu_custom_call.1
$region0: #{tpu_custom_call.1}
  #allocation0 [shape = 'u32[]', space=smem, size = 0x4, offset = 0x4, fixed_abs, tag = 'smem constant byte address 0x4 - core index']
  #allocation1 [shape = 'u32[144,128]{1,0:T(1,128)}', space=vmem, size = 0x12000, scoped, tag = 'internal scratch']
  %s0 = inlined_call_operand.vmem [shape: f32[2,32,16], index: 0, kind: input, shape index: {}]
  %s1 = inlined_call_operand.vmem [shape: bf16[32,96], index: 1, kind: input, shape index: {}]
  %s2 = inlined_call_operand.vmem [shape: f32[1,96], index: 2, kind: input, shape index: {}]
  %s3 = inlined_call_operand.vmem [shape: bf16[32,32], index: 3, kind: input, shape index: {}]
  %s4 = inlined_call_operand.vmem [shape: f32[1,32], index: 4, kind: input, shape index: {}]
  %s5 = inlined_call_operand.vmem [shape: f32[2,32,16], index: 5, kind: output, shape index: {}]
  %s6 = sld [smem:[#allocation0]]
  $region30: #{tpu_custom_call.1} parent=0
    _
  %s8 = ssub.s32 1, %s6
  %s9 = scalar_select 0, %s8, %s6
  // Predicated region
  $region2: #{tpu_custom_call.1} parent=0 // pred_check
    _
  $region3: #{tpu_custom_call.1} parent=0 // pred_check_branch
    %11 = sbr.rel (0) target = $region5
  $region4: #{tpu_custom_call.1} parent=0 // pred_region
    _
  $region5: #{tpu_custom_call.1} parent=0 // pred_fallthru
    _
  // Predicated region
  $region6: #{tpu_custom_call.1} parent=0 // pred_check
    _
  $region7: #{tpu_custom_call.1} parent=0 // pred_check_branch
    %13 = sbr.rel (0) target = $region9
  $region8: #{tpu_custom_call.1} parent=0 // pred_region
    _
  $region9: #{tpu_custom_call.1} parent=0 // pred_fallthru
    _
  // Predicated region
  $region10: #{tpu_custom_call.1} parent=0 // pred_check
    _
  $region11: #{tpu_custom_call.1} parent=0 // pred_check_branch
    %15 = sbr.rel (0) target = $region13
  $region12: #{tpu_custom_call.1} parent=0 // pred_region
    _
  $region13: #{tpu_custom_call.1} parent=0 // pred_fallthru
    _
  // Predicated region
  $region14: #{tpu_custom_call.1} parent=0 // pred_check
    _
  $region15: #{tpu_custom_call.1} parent=0 // pred_check_branch
    %17 = sbr.rel (0) target = $region17
  $region16: #{tpu_custom_call.1} parent=0 // pred_region
    _
  $region17: #{tpu_custom_call.1} parent=0 // pred_fallthru
    _
  // Predicated region
  $region18: #{tpu_custom_call.1} parent=0 // pred_check
    _
  $region19: #{tpu_custom_call.1} parent=0 // pred_check_branch
    %19 = sbr.rel (0) target = $region21
  $region20: #{tpu_custom_call.1} parent=0 // pred_region
    _
  $region21: #{tpu_custom_call.1} parent=0 // pred_fallthru
    _
  %v21 = vld [vmem:[%s0] sm:$0xff]
  %v22 = vld [vmem:[%s0 + $0x8] sm:$0xff]
  %v23 = vld [vmem:[%s0 + $0x10] sm:$0xff]
  %v24 = vld [vmem:[%s0 + $0x18] sm:$0xff]
  %25 = vxpose.xlu0.b32.start [1/16] %v21, 128
  %26 = vxpose.xlu0.b32.cont [2/16] %v22, 128
  %27 = vxpose.xlu0.b32.cont [3/16] %v23, 128
  %28 = vxpose.xlu0.b32.cont [4/16] %v24, 128
  %29 = vxpose.xlu0.b32.cont [5/16] 0.0, 128
  %30 = vxpose.xlu0.b32.cont [6/16] 0.0, 128
  %31 = vxpose.xlu0.b32.cont [7/16] 0.0, 128
  %32 = vxpose.xlu0.b32.cont [8/16] 0.0, 128
  %33 = vxpose.xlu0.b32.cont [9/16] 0.0, 128
  %34 = vxpose.xlu0.b32.cont [10/16] 0.0, 128
  %35 = vxpose.xlu0.b32.cont [11/16] 0.0, 128
  %36 = vxpose.xlu0.b32.cont [12/16] 0.0, 128
  %37 = vxpose.xlu0.b32.cont [13/16] 0.0, 128
  %38 = vxpose.xlu0.b32.cont [14/16] 0.0, 128
  %39 = vxpose.xlu0.b32.cont [15/16] 0.0, 128
  %40 = vxpose.xlu0.b32.end [16/16] 0.0, 128
  %v41 = vpop.trf.xlu0
  %v42 = vpop.trf.xlu0
  %v43 = vpop.trf.xlu0
  %v44 = vpop.trf.xlu0
  %v45 = vpop.trf.xlu0
  %v46 = vpop.trf.xlu0
  %v47 = vpop.trf.xlu0
  %v48 = vpop.trf.xlu0
  %v49 = vpop.trf.xlu0
  %v50 = vpop.trf.xlu0
  %v51 = vpop.trf.xlu0
  %v52 = vpop.trf.xlu0
  %v53 = vpop.trf.xlu0
  %v54 = vpop.trf.xlu0
  %v55 = vpop.trf.xlu0
  %v56 = vpop.trf.xlu0
  %s57 = scalar_lea.vmem %s0, 32
  %v58 = vld [vmem:[%s57] sm:$0xff]
  %v59 = vld [vmem:[%s57 + $0x8] sm:$0xff]
  %v60 = vld [vmem:[%s57 + $0x10] sm:$0xff]
  %v61 = vld [vmem:[%s57 + $0x18] sm:$0xff]
  %62 = vxpose.xlu0.b32.start [1/16] %v58, 128
  %63 = vxpose.xlu0.b32.cont [2/16] %v59, 128
  %64 = vxpose.xlu0.b32.cont [3/16] %v60, 128
  %65 = vxpose.xlu0.b32.cont [4/16] %v61, 128
  %66 = vxpose.xlu0.b32.cont [5/16] 0.0, 128
  %67 = vxpose.xlu0.b32.cont [6/16] 0.0, 128
  %68 = vxpose.xlu0.b32.cont [7/16] 0.0, 128
  %69 = vxpose.xlu0.b32.cont [8/16] 0.0, 128
  %70 = vxpose.xlu0.b32.cont [9/16] 0.0, 128
  %71 = vxpose.xlu0.b32.cont [10/16] 0.0, 128
  %72 = vxpose.xlu0.b32.cont [11/16] 0.0, 128
  %73 = vxpose.xlu0.b32.cont [12/16] 0.0, 128
  %74 = vxpose.xlu0.b32.cont [13/16] 0.0, 128
  %75 = vxpose.xlu0.b32.cont [14/16] 0.0, 128
  %76 = vxpose.xlu0.b32.cont [15/16] 0.0, 128
  %77 = vxpose.xlu0.b32.end [16/16] 0.0, 128
  %v78 = vpop.trf.xlu0
  %v79 = vpop.trf.xlu0
  %v80 = vpop.trf.xlu0
  %v81 = vpop.trf.xlu0
  %v82 = vpop.trf.xlu0
  %v83 = vpop.trf.xlu0
  %v84 = vpop.trf.xlu0
  %v85 = vpop.trf.xlu0
  %v86 = vpop.trf.xlu0
  %v87 = vpop.trf.xlu0
  %v88 = vpop.trf.xlu0
  %v89 = vpop.trf.xlu0
  %v90 = vpop.trf.xlu0
  %v91 = vpop.trf.xlu0
  %v92 = vpop.trf.xlu0
  %v93 = vpop.trf.xlu0
  %v94 = vpack.c.bf16 %v42, %v41
  %v95 = vpack.c.bf16 %v79, %v78
  %v96 = vld [vmem:[%s1] sm:$0xf]
  %v97 = vld [vmem:[%s1 + $0x4] sm:$0xf]
  %v98 = vld [vmem:[%s1 + $0x8] sm:$0xf]
  %v99 = vld [vmem:[%s1 + $0xc] sm:$0xf]
  %v100 = vld [vmem:[%s2] sm:$0x1]
  %v102 = vlaneseq
  %v103 = vshrl.u32 %v102, 7
  %v104 = vsub.s32 0, %v103
  %v105 = vrot.slane %v100, %v104
  %v111 = vunpack.c.l.b16 %v96
  %v112 = vunpack.c.l.b16 %v97
  %v113 = vunpack.c.l.b16 %v98
  %v114 = vunpack.c.l.b16 %v99
  %v115 = vpack.c.b16 %v112, %v111
  %v116 = vpack.c.b16 %v114, %v113
  %vm119 = vcmask 261120
  %v121 = vsel %vm119, %v94, 0
  %v124 = vsel %vm119, %v95, 0
  %126 = vmatprep.subr.bf16.mxu0 0
  %127 = vmatpush1.bf16.msra.mxu0 %v115
  %128 = vmatprep.subr.bf16.mxu0 0
  %129 = vmatpush1.bf16.msra.mxu0 %v116
  %130 = vmatprep.subr.bf16.mxu0 0
  %131 = vmatpush1.bf16.msra.mxu0 0
  %132 = vmatprep.subr.bf16.mxu0 0
  %133 = vmatpush1.bf16.msra.mxu0 0
  %134 = vmatprep.subr.bf16.mxu0 0
  %135 = vmatpush1.bf16.msra.mxu0 0
  %136 = vmatprep.subr.bf16.mxu0 0
  %137 = vmatpush1.bf16.msra.mxu0 0
  %138 = vmatprep.subr.bf16.mxu0 0
  %139 = vmatpush1.bf16.msra.mxu0 0
  %140 = vmatprep.subr.bf16.mxu0 0
  %141 = vmatpush1.bf16.msra.mxu0 0
  %142 = vmatprep.subr.bf16.mxu0 0
  %143 = vmatpush1.bf16.msra.mxu0 0
  %144 = vmatprep.subr.bf16.mxu0 0
  %145 = vmatpush1.bf16.msra.mxu0 0
  %146 = vmatprep.subr.bf16.mxu0 0
  %147 = vmatpush1.bf16.msra.mxu0 0
  %148 = vmatprep.subr.bf16.mxu0 0
  %149 = vmatpush1.bf16.msra.mxu0 0
  %150 = vmatprep.subr.bf16.mxu0 0
  %151 = vmatpush1.bf16.msra.mxu0 0
  %152 = vmatprep.subr.bf16.mxu0 0
  %153 = vmatpush1.bf16.msra.mxu0 0
  %154 = vmatprep.subr.bf16.mxu0 0
  %155 = vmatpush1.bf16.msra.mxu0 0
  %156 = vmatprep.subr.bf16.mxu0 0
  %157 = vmatpush1.bf16.msra.mxu0 0
  %158 = vmatprep.mubr.bf16.mxu0 0
  %159 = vmatmul.mubr.bf16.gmra.mrb[0].mxu0 %v121
  %v160 = vpop.f32.mrb[0].mxu0
  %v161 = vadd.f32 %v105, %v160
  %v162 = vpop.f32.mrb[0].mxu0
  %v163 = vpop.f32.mrb[0].mxu0
  %v164 = vadd.f32 %v105, %v163
  %v165 = vpop.f32.mrb[0].mxu0
  %166 = vmatprep.mubr.bf16.mxu0 0
  %167 = vmatmul.mubr.bf16.gmra.mrb[0].mxu0 %v124
  %v168 = vpop.f32.mrb[0].mxu0
  %v169 = vadd.f32 %v105, %v168
  %v170 = vpop.f32.mrb[0].mxu0
  %v171 = vpop.f32.mrb[0].mxu0
  %v172 = vadd.f32 %v105, %v171
  %v173 = vpop.f32.mrb[0].mxu0
  %174 = vdwg.mxu0
  %v175 = vpack.c.bf16 %v164, %v161
  %v176 = vpack.c.bf16 %v172, %v169
  %179 = vrot.lane.b32.xlu0 %v175, 120
  %v180 = vpop.permute.xlu0 %179
  %181 = vrot.lane.b32.xlu0 %v176, 120
  %v182 = vpop.permute.xlu0 %181
  %183 = vrot.lane.b32.xlu0 %v175, 112
  %v184 = vpop.permute.xlu0 %183
  %185 = vrot.lane.b32.xlu0 %v176, 112
  %v186 = vpop.permute.xlu0 %185
  %187 = vrot.lane.b32.xlu0 %v175, 104
  %v188 = vpop.permute.xlu0 %187
  %189 = vrot.lane.b32.xlu0 %v176, 104
  %v190 = vpop.permute.xlu0 %189
  %191 = vrot.lane.b32.xlu0 %v175, 96
  %v192 = vpop.permute.xlu0 %191
  %vm193 = vcmask 64512
  %v195 = vsel %vm193, %v175, 0
  %v198 = vsel %vm193, %v192, 0
  %200 = vmatprep.subr.bf16.mxu0 0
  %201 = vmatpush1.bf16.xpose.msra.mxu0 %v198
  %202 = vmatprep.subr.bf16.mxu0 0
  %203 = vmatpush1.bf16.xpose.msra.mxu0 0
  %204 = vmatprep.subr.bf16.mxu0 0
  %205 = vmatpush1.bf16.xpose.msra.mxu0 0
  %206 = vmatprep.subr.bf16.mxu0 0
  %207 = vmatpush1.bf16.xpose.msra.mxu0 0
  %208 = vmatprep.subr.bf16.mxu0 0
  %209 = vmatpush1.bf16.xpose.msra.mxu0 0
  %210 = vmatprep.subr.bf16.mxu0 0
  %211 = vmatpush1.bf16.xpose.msra.mxu0 0
  %212 = vmatprep.subr.bf16.mxu0 0
  %213 = vmatpush1.bf16.xpose.msra.mxu0 0
  %214 = vmatprep.subr.bf16.mxu0 0
  %215 = vmatpush1.bf16.xpose.msra.mxu0 0
  %216 = vmatprep.subr.bf16.mxu0 0
  %217 = vmatpush1.bf16.xpose.msra.mxu0 0
  %218 = vmatprep.subr.bf16.mxu0 0
  %219 = vmatpush1.bf16.xpose.msra.mxu0 0
  %220 = vmatprep.subr.bf16.mxu0 0
  %221 = vmatpush1.bf16.xpose.msra.mxu0 0
  %222 = vmatprep.subr.bf16.mxu0 0
  %223 = vmatpush1.bf16.xpose.msra.mxu0 0
  %224 = vmatprep.subr.bf16.mxu0 0
  %225 = vmatpush1.bf16.xpose.msra.mxu0 0
  %226 = vmatprep.subr.bf16.mxu0 0
  %227 = vmatpush1.bf16.xpose.msra.mxu0 0
  %228 = vmatprep.subr.bf16.mxu0 0
  %229 = vmatpush1.bf16.xpose.msra.mxu0 0
  %230 = vmatprep.subr.bf16.mxu0 0
  %231 = vmatpush1.bf16.xpose.msra.mxu0 0
  %232 = vmatprep.mubr.bf16.mxu0 0
  %233 = vmatmul.mubr.bf16.gmra.mrb[0].mxu0 %v195
  %v234 = vpop.f32.mrb[0].mxu0
  %v235 = vadd.f32 0.0, %v234
  %v236 = vpop.f32.mrb[0].mxu0
  %v237 = vpop.f32.mrb[0].mxu0
  %v238 = vadd.f32 0.0, %v237
  %v239 = vpop.f32.mrb[0].mxu0
  %240 = vdwg.mxu0
  %241 = vrot.lane.b32.xlu0 %v176, 96
  %v242 = vpop.permute.xlu0 %241
  %v244 = vsel %vm193, %v176, 0
  %v247 = vsel %vm193, %v242, 0
  %249 = vmatprep.subr.bf16.mxu0 0
  %250 = vmatpush1.bf16.xpose.msra.mxu0 %v247
  %251 = vmatprep.subr.bf16.mxu0 0
  %252 = vmatpush1.bf16.xpose.msra.mxu0 0
  %253 = vmatprep.subr.bf16.mxu0 0
  %254 = vmatpush1.bf16.xpose.msra.mxu0 0
  %255 = vmatprep.subr.bf16.mxu0 0
  %256 = vmatpush1.bf16.xpose.msra.mxu0 0
  %257 = vmatprep.subr.bf16.mxu0 0
  %258 = vmatpush1.bf16.xpose.msra.mxu0 0
  %259 = vmatprep.subr.bf16.mxu0 0
  %260 = vmatpush1.bf16.xpose.msra.mxu0 0
  %261 = vmatprep.subr.bf16.mxu0 0
  %262 = vmatpush1.bf16.xpose.msra.mxu0 0
  %263 = vmatprep.subr.bf16.mxu0 0
  %264 = vmatpush1.bf16.xpose.msra.mxu0 0
  %265 = vmatprep.subr.bf16.mxu0 0
  %266 = vmatpush1.bf16.xpose.msra.mxu0 0
  %267 = vmatprep.subr.bf16.mxu0 0
  %268 = vmatpush1.bf16.xpose.msra.mxu0 0
  %269 = vmatprep.subr.bf16.mxu0 0
  %270 = vmatpush1.bf16.xpose.msra.mxu0 0
  %271 = vmatprep.subr.bf16.mxu0 0
  %272 = vmatpush1.bf16.xpose.msra.mxu0 0
  %273 = vmatprep.subr.bf16.mxu0 0
  %274 = vmatpush1.bf16.xpose.msra.mxu0 0
  %275 = vmatprep.subr.bf16.mxu0 0
  %276 = vmatpush1.bf16.xpose.msra.mxu0 0
  %277 = vmatprep.subr.bf16.mxu0 0
  %278 = vmatpush1.bf16.xpose.msra.mxu0 0
  %279 = vmatprep.subr.bf16.mxu0 0
  %280 = vmatpush1.bf16.xpose.msra.mxu0 0
  %281 = vmatprep.mubr.bf16.mxu0 0
  %282 = vmatmul.mubr.bf16.gmra.mrb[0].mxu0 %v244
  %v283 = vpop.f32.mrb[0].mxu0
  %v284 = vadd.f32 0.0, %v283
  %v285 = vpop.f32.mrb[0].mxu0
  %v286 = vpop.f32.mrb[0].mxu0
  %v287 = vadd.f32 0.0, %v286
  %v288 = vpop.f32.mrb[0].mxu0
  %289 = vdwg.mxu0
  %290 = vrot.lane.b32.xlu0 %v180, 96
  %v291 = vpop.permute.xlu0 %290
  %v293 = vsel %vm193, %v180, 0
  %v296 = vsel %vm193, %v291, 0
  %298 = vmatprep.subr.bf16.mxu0 0
  %299 = vmatpush1.bf16.xpose.msra.mxu0 %v296
  %300 = vmatprep.subr.bf16.mxu0 0
  %301 = vmatpush1.bf16.xpose.msra.mxu0 0
  %302 = vmatprep.subr.bf16.mxu0 0
  %303 = vmatpush1.bf16.xpose.msra.mxu0 0
  %304 = vmatprep.subr.bf16.mxu0 0
  %305 = vmatpush1.bf16.xpose.msra.mxu0 0
  %306 = vmatprep.subr.bf16.mxu0 0
  %307 = vmatpush1.bf16.xpose.msra.mxu0 0
  %308 = vmatprep.subr.bf16.mxu0 0
  %309 = vmatpush1.bf16.xpose.msra.mxu0 0
  %310 = vmatprep.subr.bf16.mxu0 0
  %311 = vmatpush1.bf16.xpose.msra.mxu0 0
  %312 = vmatprep.subr.bf16.mxu0 0
  %313 = vmatpush1.bf16.xpose.msra.mxu0 0
  %314 = vmatprep.subr.bf16.mxu0 0
  %315 = vmatpush1.bf16.xpose.msra.mxu0 0
  %316 = vmatprep.subr.bf16.mxu0 0
  %317 = vmatpush1.bf16.xpose.msra.mxu0 0
  %318 = vmatprep.subr.bf16.mxu0 0
  %319 = vmatpush1.bf16.xpose.msra.mxu0 0
  %320 = vmatprep.subr.bf16.mxu0 0
  %321 = vmatpush1.bf16.xpose.msra.mxu0 0
  %322 = vmatprep.subr.bf16.mxu0 0
  %323 = vmatpush1.bf16.xpose.msra.mxu0 0
  %324 = vmatprep.subr.bf16.mxu0 0
  %325 = vmatpush1.bf16.xpose.msra.mxu0 0
  %326 = vmatprep.subr.bf16.mxu0 0
  %327 = vmatpush1.bf16.xpose.msra.mxu0 0
  %328 = vmatprep.subr.bf16.mxu0 0
  %329 = vmatpush1.bf16.xpose.msra.mxu0 0
  %330 = vmatprep.mubr.bf16.mxu0 0
  %331 = vmatmul.mubr.bf16.gmra.mrb[0].mxu0 %v293
  %v332 = vpop.f32.mrb[0].mxu0
  %v333 = vadd.f32 0.0, %v332
  %v334 = vpop.f32.mrb[0].mxu0
  %v335 = vpop.f32.mrb[0].mxu0
  %v336 = vadd.f32 0.0, %v335
  %v337 = vpop.f32.mrb[0].mxu0
  %338 = vdwg.mxu0
  %339 = vrot.lane.b32.xlu0 %v182, 96
  %v340 = vpop.permute.xlu0 %339
  %v342 = vsel %vm193, %v182, 0
  %v345 = vsel %vm193, %v340, 0
  %347 = vmatprep.subr.bf16.mxu0 0
  %348 = vmatpush1.bf16.xpose.msra.mxu0 %v345
  %349 = vmatprep.subr.bf16.mxu0 0
  %350 = vmatpush1.bf16.xpose.msra.mxu0 0
  %351 = vmatprep.subr.bf16.mxu0 0
  %352 = vmatpush1.bf16.xpose.msra.mxu0 0
  %353 = vmatprep.subr.bf16.mxu0 0
  %354 = vmatpush1.bf16.xpose.msra.mxu0 0
  %355 = vmatprep.subr.bf16.mxu0 0
  %356 = vmatpush1.bf16.xpose.msra.mxu0 0
  %357 = vmatprep.subr.bf16.mxu0 0
  %358 = vmatpush1.bf16.xpose.msra.mxu0 0
  %359 = vmatprep.subr.bf16.mxu0 0
  %360 = vmatpush1.bf16.xpose.msra.mxu0 0
  %361 = vmatprep.subr.bf16.mxu0 0
  %362 = vmatpush1.bf16.xpose.msra.mxu0 0
  %363 = vmatprep.subr.bf16.mxu0 0
  %364 = vmatpush1.bf16.xpose.msra.mxu0 0
  %365 = vmatprep.subr.bf16.mxu0 0
  %366 = vmatpush1.bf16.xpose.msra.mxu0 0
  %367 = vmatprep.subr.bf16.mxu0 0
  %368 = vmatpush1.bf16.xpose.msra.mxu0 0
  %369 = vmatprep.subr.bf16.mxu0 0
  %370 = vmatpush1.bf16.xpose.msra.mxu0 0
  %371 = vmatprep.subr.bf16.mxu0 0
  %372 = vmatpush1.bf16.xpose.msra.mxu0 0
  %373 = vmatprep.subr.bf16.mxu0 0
  %374 = vmatpush1.bf16.xpose.msra.mxu0 0
  %375 = vmatprep.subr.bf16.mxu0 0
  %376 = vmatpush1.bf16.xpose.msra.mxu0 0
  %377 = vmatprep.subr.bf16.mxu0 0
  %378 = vmatpush1.bf16.xpose.msra.mxu0 0
  %379 = vmatprep.mubr.bf16.mxu0 0
  %380 = vmatmul.mubr.bf16.gmra.mrb[0].mxu0 %v342
  %v381 = vpop.f32.mrb[0].mxu0
  %v382 = vadd.f32 0.0, %v381
  %v383 = vpop.f32.mrb[0].mxu0
  %v384 = vpop.f32.mrb[0].mxu0
  %v385 = vadd.f32 0.0, %v384
  %v386 = vpop.f32.mrb[0].mxu0
  %387 = vdwg.mxu0
  %388 = vrot.lane.b32.xlu0 %v184, 96
  %v389 = vpop.permute.xlu0 %388
  %v391 = vsel %vm193, %v184, 0
  %v394 = vsel %vm193, %v389, 0
  %396 = vmatprep.subr.bf16.mxu0 0
  %397 = vmatpush1.bf16.xpose.msra.mxu0 %v394
  %398 = vmatprep.subr.bf16.mxu0 0
  %399 = vmatpush1.bf16.xpose.msra.mxu0 0
  %400 = vmatprep.subr.bf16.mxu0 0
  %401 = vmatpush1.bf16.xpose.msra.mxu0 0
  %402 = vmatprep.subr.bf16.mxu0 0
  %403 = vmatpush1.bf16.xpose.msra.mxu0 0
  %404 = vmatprep.subr.bf16.mxu0 0
  %405 = vmatpush1.bf16.xpose.msra.mxu0 0
  %406 = vmatprep.subr.bf16.mxu0 0
  %407 = vmatpush1.bf16.xpose.msra.mxu0 0
  %408 = vmatprep.subr.bf16.mxu0 0
  %409 = vmatpush1.bf16.xpose.msra.mxu0 0
  %410 = vmatprep.subr.bf16.mxu0 0
  %411 = vmatpush1.bf16.xpose.msra.mxu0 0
  %412 = vmatprep.subr.bf16.mxu0 0
  %413 = vmatpush1.bf16.xpose.msra.mxu0 0
  %414 = vmatprep.subr.bf16.mxu0 0
  %415 = vmatpush1.bf16.xpose.msra.mxu0 0
  %416 = vmatprep.subr.bf16.mxu0 0
  %417 = vmatpush1.bf16.xpose.msra.mxu0 0
  %418 = vmatprep.subr.bf16.mxu0 0
  %419 = vmatpush1.bf16.xpose.msra.mxu0 0
  %420 = vmatprep.subr.bf16.mxu0 0
  %421 = vmatpush1.bf16.xpose.msra.mxu0 0
  %422 = vmatprep.subr.bf16.mxu0 0
  %423 = vmatpush1.bf16.xpose.msra.mxu0 0
  %424 = vmatprep.subr.bf16.mxu0 0
  %425 = vmatpush1.bf16.xpose.msra.mxu0 0
  %426 = vmatprep.subr.bf16.mxu0 0
  %427 = vmatpush1.bf16.xpose.msra.mxu0 0
  %428 = vmatprep.mubr.bf16.mxu0 0
  %429 = vmatmul.mubr.bf16.gmra.mrb[0].mxu0 %v391
  %v430 = vpop.f32.mrb[0].mxu0
  %v431 = vadd.f32 0.0, %v430
  %v432 = vpop.f32.mrb[0].mxu0
  %v433 = vpop.f32.mrb[0].mxu0
  %v434 = vadd.f32 0.0, %v433
  %v435 = vpop.f32.mrb[0].mxu0
  %436 = vdwg.mxu0
  %437 = vrot.lane.b32.xlu0 %v186, 96
  %v438 = vpop.permute.xlu0 %437
  %v440 = vsel %vm193, %v186, 0
  %v443 = vsel %vm193, %v438, 0
  %445 = vmatprep.subr.bf16.mxu0 0
  %446 = vmatpush1.bf16.xpose.msra.mxu0 %v443
  %447 = vmatprep.subr.bf16.mxu0 0
  %448 = vmatpush1.bf16.xpose.msra.mxu0 0
  %449 = vmatprep.subr.bf16.mxu0 0
  %450 = vmatpush1.bf16.xpose.msra.mxu0 0
  %451 = vmatprep.subr.bf16.mxu0 0
  %452 = vmatpush1.bf16.xpose.msra.mxu0 0
  %453 = vmatprep.subr.bf16.mxu0 0
  %454 = vmatpush1.bf16.xpose.msra.mxu0 0
  %455 = vmatprep.subr.bf16.mxu0 0
  %456 = vmatpush1.bf16.xpose.msra.mxu0 0
  %457 = vmatprep.subr.bf16.mxu0 0
  %458 = vmatpush1.bf16.xpose.msra.mxu0 0
  %459 = vmatprep.subr.bf16.mxu0 0
  %460 = vmatpush1.bf16.xpose.msra.mxu0 0
  %461 = vmatprep.subr.bf16.mxu0 0
  %462 = vmatpush1.bf16.xpose.msra.mxu0 0
  %463 = vmatprep.subr.bf16.mxu0 0
  %464 = vmatpush1.bf16.xpose.msra.mxu0 0
  %465 = vmatprep.subr.bf16.mxu0 0
  %466 = vmatpush1.bf16.xpose.msra.mxu0 0
  %467 = vmatprep.subr.bf16.mxu0 0
  %468 = vmatpush1.bf16.xpose.msra.mxu0 0
  %469 = vmatprep.subr.bf16.mxu0 0
  %470 = vmatpush1.bf16.xpose.msra.mxu0 0
  %471 = vmatprep.subr.bf16.mxu0 0
  %472 = vmatpush1.bf16.xpose.msra.mxu0 0
  %473 = vmatprep.subr.bf16.mxu0 0
  %474 = vmatpush1.bf16.xpose.msra.mxu0 0
  %475 = vmatprep.subr.bf16.mxu0 0
  %476 = vmatpush1.bf16.xpose.msra.mxu0 0
  %477 = vmatprep.mubr.bf16.mxu0 0
  %478 = vmatmul.mubr.bf16.gmra.mrb[0].mxu0 %v440
  %v479 = vpop.f32.mrb[0].mxu0
  %v480 = vadd.f32 0.0, %v479
  %v481 = vpop.f32.mrb[0].mxu0
  %v482 = vpop.f32.mrb[0].mxu0
  %v483 = vadd.f32 0.0, %v482
  %v484 = vpop.f32.mrb[0].mxu0
  %485 = vdwg.mxu0
  %486 = vrot.lane.b32.xlu0 %v188, 96
  %v487 = vpop.permute.xlu0 %486
  %v489 = vsel %vm193, %v188, 0
  %v492 = vsel %vm193, %v487, 0
  %494 = vmatprep.subr.bf16.mxu0 0
  %495 = vmatpush1.bf16.xpose.msra.mxu0 %v492
  %496 = vmatprep.subr.bf16.mxu0 0
  %497 = vmatpush1.bf16.xpose.msra.mxu0 0
  %498 = vmatprep.subr.bf16.mxu0 0
  %499 = vmatpush1.bf16.xpose.msra.mxu0 0
  %500 = vmatprep.subr.bf16.mxu0 0
  %501 = vmatpush1.bf16.xpose.msra.mxu0 0
  %502 = vmatprep.subr.bf16.mxu0 0
  %503 = vmatpush1.bf16.xpose.msra.mxu0 0
  %504 = vmatprep.subr.bf16.mxu0 0
  %505 = vmatpush1.bf16.xpose.msra.mxu0 0
  %506 = vmatprep.subr.bf16.mxu0 0
  %507 = vmatpush1.bf16.xpose.msra.mxu0 0
  %508 = vmatprep.subr.bf16.mxu0 0
  %509 = vmatpush1.bf16.xpose.msra.mxu0 0
  %510 = vmatprep.subr.bf16.mxu0 0
  %511 = vmatpush1.bf16.xpose.msra.mxu0 0
  %512 = vmatprep.subr.bf16.mxu0 0
  %513 = vmatpush1.bf16.xpose.msra.mxu0 0
  %514 = vmatprep.subr.bf16.mxu0 0
  %515 = vmatpush1.bf16.xpose.msra.mxu0 0
  %516 = vmatprep.subr.bf16.mxu0 0
  %517 = vmatpush1.bf16.xpose.msra.mxu0 0
  %518 = vmatprep.subr.bf16.mxu0 0
  %519 = vmatpush1.bf16.xpose.msra.mxu0 0
  %520 = vmatprep.subr.bf16.mxu0 0
  %521 = vmatpush1.bf16.xpose.msra.mxu0 0
  %522 = vmatprep.subr.bf16.mxu0 0
  %523 = vmatpush1.bf16.xpose.msra.mxu0 0
  %524 = vmatprep.subr.bf16.mxu0 0
  %525 = vmatpush1.bf16.xpose.msra.mxu0 0
  %526 = vmatprep.mubr.bf16.mxu0 0
  %527 = vmatmul.mubr.bf16.gmra.mrb[0].mxu0 %v489
  %v528 = vpop.f32.mrb[0].mxu0
  %v529 = vadd.f32 0.0, %v528
  %v530 = vpop.f32.mrb[0].mxu0
  %v531 = vpop.f32.mrb[0].mxu0
  %v532 = vadd.f32 0.0, %v531
  %v533 = vpop.f32.mrb[0].mxu0
  %534 = vdwg.mxu0
  %535 = vrot.lane.b32.xlu0 %v190, 96
  %v536 = vpop.permute.xlu0 %535
  %v538 = vsel %vm193, %v190, 0
  %v541 = vsel %vm193, %v536, 0
  %543 = vmatprep.subr.bf16.mxu0 0
  %544 = vmatpush1.bf16.xpose.msra.mxu0 %v541
  %545 = vmatprep.subr.bf16.mxu0 0
  %546 = vmatpush1.bf16.xpose.msra.mxu0 0
  %547 = vmatprep.subr.bf16.mxu0 0
  %548 = vmatpush1.bf16.xpose.msra.mxu0 0
  %549 = vmatprep.subr.bf16.mxu0 0
  %550 = vmatpush1.bf16.xpose.msra.mxu0 0
  %551 = vmatprep.subr.bf16.mxu0 0
  %552 = vmatpush1.bf16.xpose.msra.mxu0 0
  %553 = vmatprep.subr.bf16.mxu0 0
  %554 = vmatpush1.bf16.xpose.msra.mxu0 0
  %555 = vmatprep.subr.bf16.mxu0 0
  %556 = vmatpush1.bf16.xpose.msra.mxu0 0
  %557 = vmatprep.subr.bf16.mxu0 0
  %558 = vmatpush1.bf16.xpose.msra.mxu0 0
  %559 = vmatprep.subr.bf16.mxu0 0
  %560 = vmatpush1.bf16.xpose.msra.mxu0 0
  %561 = vmatprep.subr.bf16.mxu0 0
  %562 = vmatpush1.bf16.xpose.msra.mxu0 0
  %563 = vmatprep.subr.bf16.mxu0 0
  %564 = vmatpush1.bf16.xpose.msra.mxu0 0
  %565 = vmatprep.subr.bf16.mxu0 0
  %566 = vmatpush1.bf16.xpose.msra.mxu0 0
  %567 = vmatprep.subr.bf16.mxu0 0
  %568 = vmatpush1.bf16.xpose.msra.mxu0 0
  %569 = vmatprep.subr.bf16.mxu0 0
  %570 = vmatpush1.bf16.xpose.msra.mxu0 0
  %571 = vmatprep.subr.bf16.mxu0 0
  %572 = vmatpush1.bf16.xpose.msra.mxu0 0
  %573 = vmatprep.subr.bf16.mxu0 0
  %574 = vmatpush1.bf16.xpose.msra.mxu0 0
  %575 = vmatprep.mubr.bf16.mxu0 0
  %576 = vmatmul.mubr.bf16.gmra.mrb[0].mxu0 %v538
  %v577 = vpop.f32.mrb[0].mxu0
  %v578 = vadd.f32 0.0, %v577
  %v579 = vpop.f32.mrb[0].mxu0
  %v580 = vpop.f32.mrb[0].mxu0
  %v581 = vadd.f32 0.0, %v580
  %v582 = vpop.f32.mrb[0].mxu0
  %583 = vdwg.mxu0
  %vm584 = vcmask 130048
  %v585 = vsel %vm584, %v235, -inf
  %586 = vmax.xlane.f32.xlu0 %v585
  %v587 = vpop.xlane.xlu0 %586
  %v588 = vsel %vm584, %v238, -inf
  %589 = vmax.xlane.f32.xlu0 %v588
  %v590 = vpop.xlane.xlu0 %589
  %v591 = vsel %vm584, %v284, -inf
  %592 = vmax.xlane.f32.xlu0 %v591
  %v593 = vpop.xlane.xlu0 %592
  %v594 = vsel %vm584, %v287, -inf
  %595 = vmax.xlane.f32.xlu0 %v594
  %v596 = vpop.xlane.xlu0 %595
  %v597 = vsel %vm584, %v333, -inf
  %598 = vmax.xlane.f32.xlu0 %v597
  %v599 = vpop.xlane.xlu0 %598
  %v600 = vsel %vm584, %v336, -inf
  %601 = vmax.xlane.f32.xlu0 %v600
  %v602 = vpop.xlane.xlu0 %601
  %v603 = vsel %vm584, %v382, -inf
  %604 = vmax.xlane.f32.xlu0 %v603
  %v605 = vpop.xlane.xlu0 %604
  %v606 = vsel %vm584, %v385, -inf
  %607 = vmax.xlane.f32.xlu0 %v606
  %v608 = vpop.xlane.xlu0 %607
  %v609 = vsel %vm584, %v431, -inf
  %610 = vmax.xlane.f32.xlu0 %v609
  %v611 = vpop.xlane.xlu0 %610
  %v612 = vsel %vm584, %v434, -inf
  %613 = vmax.xlane.f32.xlu0 %v612
  %v614 = vpop.xlane.xlu0 %613
  %v615 = vsel %vm584, %v480, -inf
  %616 = vmax.xlane.f32.xlu0 %v615
  %v617 = vpop.xlane.xlu0 %616
  %v618 = vsel %vm584, %v483, -inf
  %619 = vmax.xlane.f32.xlu0 %v618
  %v620 = vpop.xlane.xlu0 %619
  %v621 = vsel %vm584, %v529, -inf
  %622 = vmax.xlane.f32.xlu0 %v621
  %v623 = vpop.xlane.xlu0 %622
  %v624 = vsel %vm584, %v532, -inf
  %625 = vmax.xlane.f32.xlu0 %v624
  %v626 = vpop.xlane.xlu0 %625
  %v627 = vsel %vm584, %v578, -inf
  %628 = vmax.xlane.f32.xlu0 %v627
  %v629 = vpop.xlane.xlu0 %628
  %v630 = vsel %vm584, %v581, -inf
  %631 = vmax.xlane.f32.xlu0 %v630
  %v632 = vpop.xlane.xlu0 %631
  %v633 = vsub.f32 %v235, %v587
  %v634 = vsub.f32 %v238, %v590
  %v635 = vsub.f32 %v284, %v593
  %v636 = vsub.f32 %v287, %v596
  %v637 = vsub.f32 %v333, %v599
  %v638 = vsub.f32 %v336, %v602
  %v639 = vsub.f32 %v382, %v605
  %v640 = vsub.f32 %v385, %v608
  %v641 = vsub.f32 %v431, %v611
  %v642 = vsub.f32 %v434, %v614
  %v643 = vsub.f32 %v480, %v617
  %v644 = vsub.f32 %v483, %v620
  %v645 = vsub.f32 %v529, %v623
  %v646 = vsub.f32 %v532, %v626
  %v647 = vsub.f32 %v578, %v629
  %v648 = vsub.f32 %v581, %v632
  %v649 = vmul.f32 %v633, 1.442695
  %v650 = vpow.pop %v649
  %v651 = vmul.f32 %v634, 1.442695
  %v652 = vpow.pop %v651
  %v653 = vmul.f32 %v635, 1.442695
  %v654 = vpow.pop %v653
  %v655 = vmul.f32 %v636, 1.442695
  %v656 = vpow.pop %v655
  %v657 = vmul.f32 %v637, 1.442695
  %v658 = vpow.pop %v657
  %v659 = vmul.f32 %v638, 1.442695
  %v660 = vpow.pop %v659
  %v661 = vmul.f32 %v639, 1.442695
  %v662 = vpow.pop %v661
  %v663 = vmul.f32 %v640, 1.442695
  %v664 = vpow.pop %v663
  %v665 = vmul.f32 %v641, 1.442695
  %v666 = vpow.pop %v665
  %v667 = vmul.f32 %v642, 1.442695
  %v668 = vpow.pop %v667
  %v669 = vmul.f32 %v643, 1.442695
  %v670 = vpow.pop %v669
  %v671 = vmul.f32 %v644, 1.442695
  %v672 = vpow.pop %v671
  %v673 = vmul.f32 %v645, 1.442695
  %v674 = vpow.pop %v673
  %v675 = vmul.f32 %v646, 1.442695
  %v676 = vpow.pop %v675
  %v677 = vmul.f32 %v647, 1.442695
  %v678 = vpow.pop %v677
  %v679 = vmul.f32 %v648, 1.442695
  %v680 = vpow.pop %v679
  %v681 = vsel %vm584, %v650, 0.0
  %682 = vadd.xlane.f32.xlu0 %v681
  %v683 = vpop.xlane.xlu0 %682
  %v684 = vsel %vm584, %v652, 0.0
  %685 = vadd.xlane.f32.xlu0 %v684
  %v686 = vpop.xlane.xlu0 %685
  %v687 = vsel %vm584, %v654, 0.0
  %688 = vadd.xlane.f32.xlu0 %v687
  %v689 = vpop.xlane.xlu0 %688
  %v690 = vsel %vm584, %v656, 0.0
  %691 = vadd.xlane.f32.xlu0 %v690
  %v692 = vpop.xlane.xlu0 %691
  %v693 = vsel %vm584, %v658, 0.0
  %694 = vadd.xlane.f32.xlu0 %v693
  %v695 = vpop.xlane.xlu0 %694
  %v696 = vsel %vm584, %v660, 0.0
  %697 = vadd.xlane.f32.xlu0 %v696
  %v698 = vpop.xlane.xlu0 %697
  %v699 = vsel %vm584, %v662, 0.0
  %700 = vadd.xlane.f32.xlu0 %v699
  %v701 = vpop.xlane.xlu0 %700
  %v702 = vsel %vm584, %v664, 0.0
  %703 = vadd.xlane.f32.xlu0 %v702
  %v704 = vpop.xlane.xlu0 %703
  %v705 = vsel %vm584, %v666, 0.0
  %706 = vadd.xlane.f32.xlu0 %v705
  %v707 = vpop.xlane.xlu0 %706
  %v708 = vsel %vm584, %v668, 0.0
  %709 = vadd.xlane.f32.xlu0 %v708
  %v710 = vpop.xlane.xlu0 %709
  %v711 = vsel %vm584, %v670, 0.0
  %712 = vadd.xlane.f32.xlu0 %v711
  %v713 = vpop.xlane.xlu0 %712
  %v714 = vsel %vm584, %v672, 0.0
  %715 = vadd.xlane.f32.xlu0 %v714
  %v716 = vpop.xlane.xlu0 %715
  %v717 = vsel %vm584, %v674, 0.0
  %718 = vadd.xlane.f32.xlu0 %v717
  %v719 = vpop.xlane.xlu0 %718
  %v720 = vsel %vm584, %v676, 0.0
  %721 = vadd.xlane.f32.xlu0 %v720
  %v722 = vpop.xlane.xlu0 %721
  %v723 = vsel %vm584, %v678, 0.0
  %724 = vadd.xlane.f32.xlu0 %v723
  %v725 = vpop.xlane.xlu0 %724
  %v726 = vsel %vm584, %v680, 0.0
  %727 = vadd.xlane.f32.xlu0 %v726
  %v728 = vpop.xlane.xlu0 %727
  %v729 = vrcp.pop %v683
  %v730 = vrcp.pop %v686
  %v731 = vrcp.pop %v689
  %v732 = vrcp.pop %v692
  %v733 = vrcp.pop %v695
  %v734 = vrcp.pop %v698
  %v735 = vrcp.pop %v701
  %v736 = vrcp.pop %v704
  %v737 = vrcp.pop %v707
  %v738 = vrcp.pop %v710
  %v739 = vrcp.pop %v713
  %v740 = vrcp.pop %v716
  %v741 = vrcp.pop %v719
  %v742 = vrcp.pop %v722
  %v743 = vrcp.pop %v725
  %v744 = vrcp.pop %v728
  %v745 = vmul.f32 %v650, %v729
  %v746 = vmul.f32 %v652, %v730
  %v747 = vmul.f32 %v654, %v731
  %v748 = vmul.f32 %v656, %v732
  %v749 = vmul.f32 %v658, %v733
  %v750 = vmul.f32 %v660, %v734
  %v751 = vmul.f32 %v662, %v735
  %v752 = vmul.f32 %v664, %v736
  %v753 = vmul.f32 %v666, %v737
  %v754 = vmul.f32 %v668, %v738
  %v755 = vmul.f32 %v670, %v739
  %v756 = vmul.f32 %v672, %v740
  %v757 = vmul.f32 %v674, %v741
  %v758 = vmul.f32 %v676, %v742
  %v759 = vmul.f32 %v678, %v743
  %v760 = vmul.f32 %v680, %v744
  %v761 = vpack.c.bf16 %v746, %v745
  %v762 = vpack.c.bf16 %v748, %v747
  %v763 = vpack.c.bf16 %v750, %v749
  %v764 = vpack.c.bf16 %v752, %v751
  %v765 = vpack.c.bf16 %v754, %v753
  %v766 = vpack.c.bf16 %v756, %v755
  %v767 = vpack.c.bf16 %v758, %v757
  %v768 = vpack.c.bf16 %v760, %v759
  %769 = vrot.lane.b32.xlu0 %v175, 64
  %v770 = vpop.permute.xlu0 %769
  %v773 = vsel %vm584, %v761, 0
  %775 = vmatprep.subr.bf16.mxu0 0
  %776 = vmatpush1.bf16.msra.mxu0 %v770
  %777 = vmatprep.subr.bf16.mxu0 0
  %778 = vmatpush1.bf16.msra.mxu0 0
  %779 = vmatprep.subr.bf16.mxu0 0
  %780 = vmatpush1.bf16.msra.mxu0 0
  %781 = vmatprep.subr.bf16.mxu0 0
  %782 = vmatpush1.bf16.msra.mxu0 0
  %783 = vmatprep.subr.bf16.mxu0 0
  %784 = vmatpush1.bf16.msra.mxu0 0
  %785 = vmatprep.subr.bf16.mxu0 0
  %786 = vmatpush1.bf16.msra.mxu0 0
  %787 = vmatprep.subr.bf16.mxu0 0
  %788 = vmatpush1.bf16.msra.mxu0 0
  %789 = vmatprep.subr.bf16.mxu0 0
  %790 = vmatpush1.bf16.msra.mxu0 0
  %791 = vmatprep.subr.bf16.mxu0 0
  %792 = vmatpush1.bf16.msra.mxu0 0
  %793 = vmatprep.subr.bf16.mxu0 0
  %794 = vmatpush1.bf16.msra.mxu0 0
  %795 = vmatprep.subr.bf16.mxu0 0
  %796 = vmatpush1.bf16.msra.mxu0 0
  %797 = vmatprep.subr.bf16.mxu0 0
  %798 = vmatpush1.bf16.msra.mxu0 0
  %799 = vmatprep.subr.bf16.mxu0 0
  %800 = vmatpush1.bf16.msra.mxu0 0
  %801 = vmatprep.subr.bf16.mxu0 0
  %802 = vmatpush1.bf16.msra.mxu0 0
  %803 = vmatprep.subr.bf16.mxu0 0
  %804 = vmatpush1.bf16.msra.mxu0 0
  %805 = vmatprep.subr.bf16.mxu0 0
  %806 = vmatpush1.bf16.msra.mxu0 0
  %807 = vmatprep.mubr.bf16.mxu0 0
  %808 = vmatmul.mubr.bf16.gmra.mrb[0].mxu0 %v773
  %v809 = vpop.f32.mrb[0].mxu0
  %v810 = vadd.f32 0.0, %v809
  %v811 = vpop.f32.mrb[0].mxu0
  %v812 = vpop.f32.mrb[0].mxu0
  %v813 = vadd.f32 0.0, %v812
  %v814 = vpop.f32.mrb[0].mxu0
  %815 = vdwg.mxu0
  %816 = vrot.lane.b32.xlu0 %v176, 64
  %v817 = vpop.permute.xlu0 %816
  %v820 = vsel %vm584, %v762, 0
  %822 = vmatprep.subr.bf16.mxu0 0
  %823 = vmatpush1.bf16.msra.mxu0 %v817
  %824 = vmatprep.subr.bf16.mxu0 0
  %825 = vmatpush1.bf16.msra.mxu0 0
  %826 = vmatprep.subr.bf16.mxu0 0
  %827 = vmatpush1.bf16.msra.mxu0 0
  %828 = vmatprep.subr.bf16.mxu0 0
  %829 = vmatpush1.bf16.msra.mxu0 0
  %830 = vmatprep.subr.bf16.mxu0 0
  %831 = vmatpush1.bf16.msra.mxu0 0
  %832 = vmatprep.subr.bf16.mxu0 0
  %833 = vmatpush1.bf16.msra.mxu0 0
  %834 = vmatprep.subr.bf16.mxu0 0
  %835 = vmatpush1.bf16.msra.mxu0 0
  %836 = vmatprep.subr.bf16.mxu0 0
  %837 = vmatpush1.bf16.msra.mxu0 0
  %838 = vmatprep.subr.bf16.mxu0 0
  %839 = vmatpush1.bf16.msra.mxu0 0
  %840 = vmatprep.subr.bf16.mxu0 0
  %841 = vmatpush1.bf16.msra.mxu0 0
  %842 = vmatprep.subr.bf16.mxu0 0
  %843 = vmatpush1.bf16.msra.mxu0 0
  %844 = vmatprep.subr.bf16.mxu0 0
  %845 = vmatpush1.bf16.msra.mxu0 0
  %846 = vmatprep.subr.bf16.mxu0 0
  %847 = vmatpush1.bf16.msra.mxu0 0
  %848 = vmatprep.subr.bf16.mxu0 0
  %849 = vmatpush1.bf16.msra.mxu0 0
  %850 = vmatprep.subr.bf16.mxu0 0
  %851 = vmatpush1.bf16.msra.mxu0 0
  %852 = vmatprep.subr.bf16.mxu0 0
  %853 = vmatpush1.bf16.msra.mxu0 0
  %854 = vmatprep.mubr.bf16.mxu0 0
  %855 = vmatmul.mubr.bf16.gmra.mrb[0].mxu0 %v820
  %v856 = vpop.f32.mrb[0].mxu0
  %v857 = vadd.f32 0.0, %v856
  %v858 = vpop.f32.mrb[0].mxu0
  %v859 = vpop.f32.mrb[0].mxu0
  %v860 = vadd.f32 0.0, %v859
  %v861 = vpop.f32.mrb[0].mxu0
  %862 = vdwg.mxu0
  %863 = vrot.lane.b32.xlu0 %v180, 64
  %v864 = vpop.permute.xlu0 %863
  %v867 = vsel %vm584, %v763, 0
  %869 = vmatprep.subr.bf16.mxu0 0
  %870 = vmatpush1.bf16.msra.mxu0 %v864
  %871 = vmatprep.subr.bf16.mxu0 0
  %872 = vmatpush1.bf16.msra.mxu0 0
  %873 = vmatprep.subr.bf16.mxu0 0
  %874 = vmatpush1.bf16.msra.mxu0 0
  %875 = vmatprep.subr.bf16.mxu0 0
  %876 = vmatpush1.bf16.msra.mxu0 0
  %877 = vmatprep.subr.bf16.mxu0 0
  %878 = vmatpush1.bf16.msra.mxu0 0
  %879 = vmatprep.subr.bf16.mxu0 0
  %880 = vmatpush1.bf16.msra.mxu0 0
  %881 = vmatprep.subr.bf16.mxu0 0
  %882 = vmatpush1.bf16.msra.mxu0 0
  %883 = vmatprep.subr.bf16.mxu0 0
  %884 = vmatpush1.bf16.msra.mxu0 0
  %885 = vmatprep.subr.bf16.mxu0 0
  %886 = vmatpush1.bf16.msra.mxu0 0
  %887 = vmatprep.subr.bf16.mxu0 0
  %888 = vmatpush1.bf16.msra.mxu0 0
  %889 = vmatprep.subr.bf16.mxu0 0
  %890 = vmatpush1.bf16.msra.mxu0 0
  %891 = vmatprep.subr.bf16.mxu0 0
  %892 = vmatpush1.bf16.msra.mxu0 0
  %893 = vmatprep.subr.bf16.mxu0 0
  %894 = vmatpush1.bf16.msra.mxu0 0
  %895 = vmatprep.subr.bf16.mxu0 0
  %896 = vmatpush1.bf16.msra.mxu0 0
  %897 = vmatprep.subr.bf16.mxu0 0
  %898 = vmatpush1.bf16.msra.mxu0 0
  %899 = vmatprep.subr.bf16.mxu0 0
  %900 = vmatpush1.bf16.msra.mxu0 0
  %901 = vmatprep.mubr.bf16.mxu0 0
  %902 = vmatmul.mubr.bf16.gmra.mrb[0].mxu0 %v867
  %v903 = vpop.f32.mrb[0].mxu0
  %v904 = vadd.f32 0.0, %v903
  %v905 = vpop.f32.mrb[0].mxu0
  %v906 = vpop.f32.mrb[0].mxu0
  %v907 = vadd.f32 0.0, %v906
  %v908 = vpop.f32.mrb[0].mxu0
  %909 = vdwg.mxu0
  %910 = vrot.lane.b32.xlu0 %v182, 64
  %v911 = vpop.permute.xlu0 %910
  %v914 = vsel %vm584, %v764, 0
  %916 = vmatprep.subr.bf16.mxu0 0
  %917 = vmatpush1.bf16.msra.mxu0 %v911
  %918 = vmatprep.subr.bf16.mxu0 0
  %919 = vmatpush1.bf16.msra.mxu0 0
  %920 = vmatprep.subr.bf16.mxu0 0
  %921 = vmatpush1.bf16.msra.mxu0 0
  %922 = vmatprep.subr.bf16.mxu0 0
  %923 = vmatpush1.bf16.msra.mxu0 0
  %924 = vmatprep.subr.bf16.mxu0 0
  %925 = vmatpush1.bf16.msra.mxu0 0
  %926 = vmatprep.subr.bf16.mxu0 0
  %927 = vmatpush1.bf16.msra.mxu0 0
  %928 = vmatprep.subr.bf16.mxu0 0
  %929 = vmatpush1.bf16.msra.mxu0 0
  %930 = vmatprep.subr.bf16.mxu0 0
  %931 = vmatpush1.bf16.msra.mxu0 0
  %932 = vmatprep.subr.bf16.mxu0 0
  %933 = vmatpush1.bf16.msra.mxu0 0
  %934 = vmatprep.subr.bf16.mxu0 0
  %935 = vmatpush1.bf16.msra.mxu0 0
  %936 = vmatprep.subr.bf16.mxu0 0
  %937 = vmatpush1.bf16.msra.mxu0 0
  %938 = vmatprep.subr.bf16.mxu0 0
  %939 = vmatpush1.bf16.msra.mxu0 0
  %940 = vmatprep.subr.bf16.mxu0 0
  %941 = vmatpush1.bf16.msra.mxu0 0
  %942 = vmatprep.subr.bf16.mxu0 0
  %943 = vmatpush1.bf16.msra.mxu0 0
  %944 = vmatprep.subr.bf16.mxu0 0
  %945 = vmatpush1.bf16.msra.mxu0 0
  %946 = vmatprep.subr.bf16.mxu0 0
  %947 = vmatpush1.bf16.msra.mxu0 0
  %948 = vmatprep.mubr.bf16.mxu0 0
  %949 = vmatmul.mubr.bf16.gmra.mrb[0].mxu0 %v914
  %v950 = vpop.f32.mrb[0].mxu0
  %v951 = vadd.f32 0.0, %v950
  %v952 = vpop.f32.mrb[0].mxu0
  %v953 = vpop.f32.mrb[0].mxu0
  %v954 = vadd.f32 0.0, %v953
  %v955 = vpop.f32.mrb[0].mxu0
  %956 = vdwg.mxu0
  %957 = vrot.lane.b32.xlu0 %v184, 64
  %v958 = vpop.permute.xlu0 %957
  %v961 = vsel %vm584, %v765, 0
  %963 = vmatprep.subr.bf16.mxu0 0
  %964 = vmatpush1.bf16.msra.mxu0 %v958
  %965 = vmatprep.subr.bf16.mxu0 0
  %966 = vmatpush1.bf16.msra.mxu0 0
  %967 = vmatprep.subr.bf16.mxu0 0
  %968 = vmatpush1.bf16.msra.mxu0 0
  %969 = vmatprep.subr.bf16.mxu0 0
  %970 = vmatpush1.bf16.msra.mxu0 0
  %971 = vmatprep.subr.bf16.mxu0 0
  %972 = vmatpush1.bf16.msra.mxu0 0
  %973 = vmatprep.subr.bf16.mxu0 0
  %974 = vmatpush1.bf16.msra.mxu0 0
  %975 = vmatprep.subr.bf16.mxu0 0
  %976 = vmatpush1.bf16.msra.mxu0 0
  %977 = vmatprep.subr.bf16.mxu0 0
  %978 = vmatpush1.bf16.msra.mxu0 0
  %979 = vmatprep.subr.bf16.mxu0 0
  %980 = vmatpush1.bf16.msra.mxu0 0
  %981 = vmatprep.subr.bf16.mxu0 0
  %982 = vmatpush1.bf16.msra.mxu0 0
  %983 = vmatprep.subr.bf16.mxu0 0
  %984 = vmatpush1.bf16.msra.mxu0 0
  %985 = vmatprep.subr.bf16.mxu0 0
  %986 = vmatpush1.bf16.msra.mxu0 0
  %987 = vmatprep.subr.bf16.mxu0 0
  %988 = vmatpush1.bf16.msra.mxu0 0
  %989 = vmatprep.subr.bf16.mxu0 0
  %990 = vmatpush1.bf16.msra.mxu0 0
  %991 = vmatprep.subr.bf16.mxu0 0
  %992 = vmatpush1.bf16.msra.mxu0 0
  %993 = vmatprep.subr.bf16.mxu0 0
  %994 = vmatpush1.bf16.msra.mxu0 0
  %995 = vmatprep.mubr.bf16.mxu0 0
  %996 = vmatmul.mubr.bf16.gmra.mrb[0].mxu0 %v961
  %v997 = vpop.f32.mrb[0].mxu0
  %v998 = vadd.f32 0.0, %v997
  %v999 = vpop.f32.mrb[0].mxu0
  %v1000 = vpop.f32.mrb[0].mxu0
  %v1001 = vadd.f32 0.0, %v1000
  %v1002 = vpop.f32.mrb[0].mxu0
  %1003 = vdwg.mxu0
  %1004 = vrot.lane.b32.xlu0 %v186, 64
  %v1005 = vpop.permute.xlu0 %1004
  %v1008 = vsel %vm584, %v766, 0
  %1010 = vmatprep.subr.bf16.mxu0 0
  %1011 = vmatpush1.bf16.msra.mxu0 %v1005
  %1012 = vmatprep.subr.bf16.mxu0 0
  %1013 = vmatpush1.bf16.msra.mxu0 0
  %1014 = vmatprep.subr.bf16.mxu0 0
  %1015 = vmatpush1.bf16.msra.mxu0 0
  %1016 = vmatprep.subr.bf16.mxu0 0
  %1017 = vmatpush1.bf16.msra.mxu0 0
  %1018 = vmatprep.subr.bf16.mxu0 0
  %1019 = vmatpush1.bf16.msra.mxu0 0
  %1020 = vmatprep.subr.bf16.mxu0 0
  %1021 = vmatpush1.bf16.msra.mxu0 0
  %1022 = vmatprep.subr.bf16.mxu0 0
  %1023 = vmatpush1.bf16.msra.mxu0 0
  %1024 = vmatprep.subr.bf16.mxu0 0
  %1025 = vmatpush1.bf16.msra.mxu0 0
  %1026 = vmatprep.subr.bf16.mxu0 0
  %1027 = vmatpush1.bf16.msra.mxu0 0
  %1028 = vmatprep.subr.bf16.mxu0 0
  %1029 = vmatpush1.bf16.msra.mxu0 0
  %1030 = vmatprep.subr.bf16.mxu0 0
  %1031 = vmatpush1.bf16.msra.mxu0 0
  %1032 = vmatprep.subr.bf16.mxu0 0
  %1033 = vmatpush1.bf16.msra.mxu0 0
  %1034 = vmatprep.subr.bf16.mxu0 0
  %1035 = vmatpush1.bf16.msra.mxu0 0
  %1036 = vmatprep.subr.bf16.mxu0 0
  %1037 = vmatpush1.bf16.msra.mxu0 0
  %1038 = vmatprep.subr.bf16.mxu0 0
  %1039 = vmatpush1.bf16.msra.mxu0 0
  %1040 = vmatprep.subr.bf16.mxu0 0
  %1041 = vmatpush1.bf16.msra.mxu0 0
  %1042 = vmatprep.mubr.bf16.mxu0 0
  %1043 = vmatmul.mubr.bf16.gmra.mrb[0].mxu0 %v1008
  %v1044 = vpop.f32.mrb[0].mxu0
  %v1045 = vadd.f32 0.0, %v1044
  %v1046 = vpop.f32.mrb[0].mxu0
  %v1047 = vpop.f32.mrb[0].mxu0
  %v1048 = vadd.f32 0.0, %v1047
  %v1049 = vpop.f32.mrb[0].mxu0
  %1050 = vdwg.mxu0
  %1051 = vrot.lane.b32.xlu0 %v188, 64
  %v1052 = vpop.permute.xlu0 %1051
  %v1055 = vsel %vm584, %v767, 0
  %1057 = vmatprep.subr.bf16.mxu0 0
  %1058 = vmatpush1.bf16.msra.mxu0 %v1052
  %1059 = vmatprep.subr.bf16.mxu0 0
  %1060 = vmatpush1.bf16.msra.mxu0 0
  %1061 = vmatprep.subr.bf16.mxu0 0
  %1062 = vmatpush1.bf16.msra.mxu0 0
  %1063 = vmatprep.subr.bf16.mxu0 0
  %1064 = vmatpush1.bf16.msra.mxu0 0
  %1065 = vmatprep.subr.bf16.mxu0 0
  %1066 = vmatpush1.bf16.msra.mxu0 0
  %1067 = vmatprep.subr.bf16.mxu0 0
  %1068 = vmatpush1.bf16.msra.mxu0 0
  %1069 = vmatprep.subr.bf16.mxu0 0
  %1070 = vmatpush1.bf16.msra.mxu0 0
  %1071 = vmatprep.subr.bf16.mxu0 0
  %1072 = vmatpush1.bf16.msra.mxu0 0
  %1073 = vmatprep.subr.bf16.mxu0 0
  %1074 = vmatpush1.bf16.msra.mxu0 0
  %1075 = vmatprep.subr.bf16.mxu0 0
  %1076 = vmatpush1.bf16.msra.mxu0 0
  %1077 = vmatprep.subr.bf16.mxu0 0
  %1078 = vmatpush1.bf16.msra.mxu0 0
  %1079 = vmatprep.subr.bf16.mxu0 0
  %1080 = vmatpush1.bf16.msra.mxu0 0
  %1081 = vmatprep.subr.bf16.mxu0 0
  %1082 = vmatpush1.bf16.msra.mxu0 0
  %1083 = vmatprep.subr.bf16.mxu0 0
  %1084 = vmatpush1.bf16.msra.mxu0 0
  %1085 = vmatprep.subr.bf16.mxu0 0
  %1086 = vmatpush1.bf16.msra.mxu0 0
  %1087 = vmatprep.subr.bf16.mxu0 0
  %1088 = vmatpush1.bf16.msra.mxu0 0
  %1089 = vmatprep.mubr.bf16.mxu0 0
  %1090 = vmatmul.mubr.bf16.gmra.mrb[0].mxu0 %v1055
  %v1091 = vpop.f32.mrb[0].mxu0
  %v1092 = vadd.f32 0.0, %v1091
  %v1093 = vpop.f32.mrb[0].mxu0
  %v1094 = vpop.f32.mrb[0].mxu0
  %v1095 = vadd.f32 0.0, %v1094
  %v1096 = vpop.f32.mrb[0].mxu0
  %1097 = vdwg.mxu0
  %1098 = vrot.lane.b32.xlu0 %v190, 64
  %v1099 = vpop.permute.xlu0 %1098
  %v1102 = vsel %vm584, %v768, 0
  %1104 = vmatprep.subr.bf16.mxu0 0
  %1105 = vmatpush1.bf16.msra.mxu0 %v1099
  %1106 = vmatprep.subr.bf16.mxu0 0
  %1107 = vmatpush1.bf16.msra.mxu0 0
  %1108 = vmatprep.subr.bf16.mxu0 0
  %1109 = vmatpush1.bf16.msra.mxu0 0
  %1110 = vmatprep.subr.bf16.mxu0 0
  %1111 = vmatpush1.bf16.msra.mxu0 0
  %1112 = vmatprep.subr.bf16.mxu0 0
  %1113 = vmatpush1.bf16.msra.mxu0 0
  %1114 = vmatprep.subr.bf16.mxu0 0
  %1115 = vmatpush1.bf16.msra.mxu0 0
  %1116 = vmatprep.subr.bf16.mxu0 0
  %1117 = vmatpush1.bf16.msra.mxu0 0
  %1118 = vmatprep.subr.bf16.mxu0 0
  %1119 = vmatpush1.bf16.msra.mxu0 0
  %1120 = vmatprep.subr.bf16.mxu0 0
  %1121 = vmatpush1.bf16.msra.mxu0 0
  %1122 = vmatprep.subr.bf16.mxu0 0
  %1123 = vmatpush1.bf16.msra.mxu0 0
  %1124 = vmatprep.subr.bf16.mxu0 0
  %1125 = vmatpush1.bf16.msra.mxu0 0
  %1126 = vmatprep.subr.bf16.mxu0 0
  %1127 = vmatpush1.bf16.msra.mxu0 0
  %1128 = vmatprep.subr.bf16.mxu0 0
  %1129 = vmatpush1.bf16.msra.mxu0 0
  %1130 = vmatprep.subr.bf16.mxu0 0
  %1131 = vmatpush1.bf16.msra.mxu0 0
  %1132 = vmatprep.subr.bf16.mxu0 0
  %1133 = vmatpush1.bf16.msra.mxu0 0
  %1134 = vmatprep.subr.bf16.mxu0 0
  %1135 = vmatpush1.bf16.msra.mxu0 0
  %1136 = vmatprep.mubr.bf16.mxu0 0
  %1137 = vmatmul.mubr.bf16.gmra.mrb[0].mxu0 %v1102
  %v1138 = vpop.f32.mrb[0].mxu0
  %v1139 = vadd.f32 0.0, %v1138
  %v1140 = vpop.f32.mrb[0].mxu0
  %v1141 = vpop.f32.mrb[0].mxu0
  %v1142 = vadd.f32 0.0, %v1141
  %v1143 = vpop.f32.mrb[0].mxu0
  %1144 = vdwg.mxu0
  %v1145 = vpack.c.bf16 %v813, %v810
  %v1146 = vpack.c.bf16 %v860, %v857
  %v1147 = vpack.c.bf16 %v907, %v904
  %v1148 = vpack.c.bf16 %v954, %v951
  %v1149 = vpack.c.bf16 %v1001, %v998
  %v1150 = vpack.c.bf16 %v1048, %v1045
  %v1151 = vpack.c.bf16 %v1095, %v1092
  %v1152 = vpack.c.bf16 %v1142, %v1139
  %1155 = vrot.lane.b32.xlu0 %v1147, 8
  %v1156 = vpop.permute.xlu0 %1155
  %1157 = vrot.lane.b32.xlu0 %v1148, 8
  %v1158 = vpop.permute.xlu0 %1157
  %1161 = vrot.lane.b32.xlu0 %v1149, 16
  %v1162 = vpop.permute.xlu0 %1161
  %1163 = vrot.lane.b32.xlu0 %v1150, 16
  %v1164 = vpop.permute.xlu0 %1163
  %1167 = vrot.lane.b32.xlu0 %v1151, 24
  %v1168 = vpop.permute.xlu0 %1167
  %1169 = vrot.lane.b32.xlu0 %v1152, 24
  %v1170 = vpop.permute.xlu0 %1169
  %v1173 = vsel %vm193, %v1145, %v1156
  %v1176 = vsel %vm193, %v1146, %v1158
  %v1178 = vsel %vm584, %v1173, %v1162
  %v1180 = vsel %vm584, %v1176, %v1164
  %vm1181 = vcmask 195584
  %v1183 = vsel %vm1181, %v1178, %v1168
  %v1185 = vsel %vm1181, %v1180, %v1170
  %v1186 = vld [vmem:[%s3] sm:$0xf]
  %v1187 = vld [vmem:[%s3 + $0x4] sm:$0xf]
  %v1188 = vld [vmem:[%s3 + $0x8] sm:$0xf]
  %v1189 = vld [vmem:[%s3 + $0xc] sm:$0xf]
  %v1190 = vld [vmem:[%s4] sm:$0x1]
  %v1192 = vlaneseq
  %v1193 = vshrl.u32 %v1192, 7
  %v1194 = vsub.s32 0, %v1193
  %v1195 = vrot.slane %v1190, %v1194
  %v1201 = vunpack.c.l.b16 %v1186
  %v1202 = vunpack.c.l.b16 %v1187
  %v1203 = vunpack.c.l.b16 %v1188
  %v1204 = vunpack.c.l.b16 %v1189
  %v1205 = vpack.c.b16 %v1202, %v1201
  %v1206 = vpack.c.b16 %v1204, %v1203
  %v1209 = vsel %vm119, %v1183, 0
  %v1211 = vsel %vm119, %v1185, 0
  %1213 = vmatprep.subr.bf16.mxu0 0
  %1214 = vmatpush1.bf16.msra.mxu0 %v1205
  %1215 = vmatprep.subr.bf16.mxu0 0
  %1216 = vmatpush1.bf16.msra.mxu0 %v1206
  %1217 = vmatprep.subr.bf16.mxu0 0
  %1218 = vmatpush1.bf16.msra.mxu0 0
  %1219 = vmatprep.subr.bf16.mxu0 0
  %1220 = vmatpush1.bf16.msra.mxu0 0
  %1221 = vmatprep.subr.bf16.mxu0 0
  %1222 = vmatpush1.bf16.msra.mxu0 0
  %1223 = vmatprep.subr.bf16.mxu0 0
  %1224 = vmatpush1.bf16.msra.mxu0 0
  %1225 = vmatprep.subr.bf16.mxu0 0
  %1226 = vmatpush1.bf16.msra.mxu0 0
  %1227 = vmatprep.subr.bf16.mxu0 0
  %1228 = vmatpush1.bf16.msra.mxu0 0
  %1229 = vmatprep.subr.bf16.mxu0 0
  %1230 = vmatpush1.bf16.msra.mxu0 0
  %1231 = vmatprep.subr.bf16.mxu0 0
  %1232 = vmatpush1.bf16.msra.mxu0 0
  %1233 = vmatprep.subr.bf16.mxu0 0
  %1234 = vmatpush1.bf16.msra.mxu0 0
  %1235 = vmatprep.subr.bf16.mxu0 0
  %1236 = vmatpush1.bf16.msra.mxu0 0
  %1237 = vmatprep.subr.bf16.mxu0 0
  %1238 = vmatpush1.bf16.msra.mxu0 0
  %1239 = vmatprep.subr.bf16.mxu0 0
  %1240 = vmatpush1.bf16.msra.mxu0 0
  %1241 = vmatprep.subr.bf16.mxu0 0
  %1242 = vmatpush1.bf16.msra.mxu0 0
  %1243 = vmatprep.subr.bf16.mxu0 0
  %1244 = vmatpush1.bf16.msra.mxu0 0
  %1245 = vmatprep.mubr.bf16.mxu0 0
  %1246 = vmatmul.mubr.bf16.gmra.mrb[0].mxu0 %v1209
  %v1247 = vpop.f32.mrb[0].mxu0
  %v1248 = vadd.f32 %v1195, %v1247
  %v1249 = vpop.f32.mrb[0].mxu0
  %v1250 = vpop.f32.mrb[0].mxu0
  %v1251 = vadd.f32 %v1195, %v1250
  %v1252 = vpop.f32.mrb[0].mxu0
  %1253 = vmatprep.mubr.bf16.mxu0 0
  %1254 = vmatmul.mubr.bf16.gmra.mrb[0].mxu0 %v1211
  %v1255 = vpop.f32.mrb[0].mxu0
  %v1256 = vadd.f32 %v1195, %v1255
  %v1257 = vpop.f32.mrb[0].mxu0
  %v1258 = vpop.f32.mrb[0].mxu0
  %v1259 = vadd.f32 %v1195, %v1258
  %v1260 = vpop.f32.mrb[0].mxu0
  %1261 = vdwg.mxu0
  %1262 = vxpose.xlu0.b32.start [1/16] %v1248, 128
  %1263 = vxpose.xlu0.b32.cont [2/16] %v1251, 128
  %1264 = vxpose.xlu0.b32.cont [3/16] 0.0, 128
  %1265 = vxpose.xlu0.b32.cont [4/16] 0.0, 128
  %1266 = vxpose.xlu0.b32.cont [5/16] 0.0, 128
  %1267 = vxpose.xlu0.b32.cont [6/16] 0.0, 128
  %1268 = vxpose.xlu0.b32.cont [7/16] 0.0, 128
  %1269 = vxpose.xlu0.b32.cont [8/16] 0.0, 128
  %1270 = vxpose.xlu0.b32.cont [9/16] 0.0, 128
  %1271 = vxpose.xlu0.b32.cont [10/16] 0.0, 128
  %1272 = vxpose.xlu0.b32.cont [11/16] 0.0, 128
  %1273 = vxpose.xlu0.b32.cont [12/16] 0.0, 128
  %1274 = vxpose.xlu0.b32.cont [13/16] 0.0, 128
  %1275 = vxpose.xlu0.b32.cont [14/16] 0.0, 128
  %1276 = vxpose.xlu0.b32.cont [15/16] 0.0, 128
  %1277 = vxpose.xlu0.b32.end [16/16] 0.0, 128
  %v1278 = vpop.trf.xlu0
  %v1279 = vpop.trf.xlu0
  %v1280 = vpop.trf.xlu0
  %v1281 = vpop.trf.xlu0
  %v1282 = vpop.trf.xlu0
  %v1283 = vpop.trf.xlu0
  %v1284 = vpop.trf.xlu0
  %v1285 = vpop.trf.xlu0
  %v1286 = vpop.trf.xlu0
  %v1287 = vpop.trf.xlu0
  %v1288 = vpop.trf.xlu0
  %v1289 = vpop.trf.xlu0
  %v1290 = vpop.trf.xlu0
  %v1291 = vpop.trf.xlu0
  %v1292 = vpop.trf.xlu0
  %v1293 = vpop.trf.xlu0
  %1294 = vst.msk [vmem:[%s5] sm:$0xff] %vm584, %v1278
  %1295 = vst.msk [vmem:[%s5 + $0x8] sm:$0xff] %vm584, %v1279
  %1296 = vst.msk [vmem:[%s5 + $0x10] sm:$0xff] %vm584, %v1280
  %1297 = vst.msk [vmem:[%s5 + $0x18] sm:$0xff] %vm584, %v1281
  %1298 = vxpose.xlu0.b32.start [1/16] %v1256, 128
  %1299 = vxpose.xlu0.b32.cont [2/16] %v1259, 128
  %1300 = vxpose.xlu0.b32.cont [3/16] 0.0, 128
  %1301 = vxpose.xlu0.b32.cont [4/16] 0.0, 128
  %1302 = vxpose.xlu0.b32.cont [5/16] 0.0, 128
  %1303 = vxpose.xlu0.b32.cont [6/16] 0.0, 128
  %1304 = vxpose.xlu0.b32.cont [7/16] 0.0, 128
  %1305 = vxpose.xlu0.b32.cont [8/16] 0.0, 128
  %1306 = vxpose.xlu0.b32.cont [9/16] 0.0, 128
  %1307 = vxpose.xlu0.b32.cont [10/16] 0.0, 128
  %1308 = vxpose.xlu0.b32.cont [11/16] 0.0, 128
  %1309 = vxpose.xlu0.b32.cont [12/16] 0.0, 128
  %1310 = vxpose.xlu0.b32.cont [13/16] 0.0, 128
  %1311 = vxpose.xlu0.b32.cont [14/16] 0.0, 128
  %1312 = vxpose.xlu0.b32.cont [15/16] 0.0, 128
  %1313 = vxpose.xlu0.b32.end [16/16] 0.0, 128
  %v1314 = vpop.trf.xlu0
  %v1315 = vpop.trf.xlu0
  %v1316 = vpop.trf.xlu0
  %v1317 = vpop.trf.xlu0
  %v1318 = vpop.trf.xlu0
  %v1319 = vpop.trf.xlu0
  %v1320 = vpop.trf.xlu0
  %v1321 = vpop.trf.xlu0
  %v1322 = vpop.trf.xlu0
  %v1323 = vpop.trf.xlu0
  %v1324 = vpop.trf.xlu0
  %v1325 = vpop.trf.xlu0
  %v1326 = vpop.trf.xlu0
  %v1327 = vpop.trf.xlu0
  %v1328 = vpop.trf.xlu0
  %v1329 = vpop.trf.xlu0
  %s1330 = scalar_lea.vmem %s5, 32
  %1331 = vst.msk [vmem:[%s1330] sm:$0xff] %vm584, %v1314
  %1332 = vst.msk [vmem:[%s1330 + $0x8] sm:$0xff] %vm584, %v1315
  %1333 = vst.msk [vmem:[%s1330 + $0x10] sm:$0xff] %vm584, %v1316
  %1334 = vst.msk [vmem:[%s1330 + $0x18] sm:$0xff] %vm584, %v1317
  // Predicated region
  $region22: #{tpu_custom_call.1} parent=0 // pred_check
    _
  $region23: #{tpu_custom_call.1} parent=0 // pred_check_branch
    %1336 = sbr.rel (0) target = $region25
  $region24: #{tpu_custom_call.1} parent=0 // pred_region
    _
  $region25: #{tpu_custom_call.1} parent=0 // pred_fallthru
    _
  // Predicated region
  $region26: #{tpu_custom_call.1} parent=0 // pred_check
    _
  $region27: #{tpu_custom_call.1} parent=0 // pred_check_branch
    %1338 = sbr.rel (0) target = $region29
  $region28: #{tpu_custom_call.1} parent=0 // pred_region
    _
  $region29: #{tpu_custom_call.1} parent=0 // pred_fallthru
    _

</llo_original>
